<compile_context>
chip_gen: v5e
topology: v5e:2x2
jax: 0.10.0
libtpu: 0.0.40
codegen_flags: <defaults>
</compile_context>

<pallas_src>
import functools

import jax
import jax.numpy as jnp
from jax.experimental import pallas as pl
from jax.experimental.pallas import tpu as pltpu

# ---- module hyper-parameters (match SKConv constructor defaults) ----
M = 2
R = 16
L = 32
GROUPS = 32
STRIDE = 1          # only the default stride=1 path is implemented
BN_EPS = 1e-5
LANE = 128          # TPU lane width; output / matmul-N dim padded to this


def _skconv_kernel(x_ref, wconv_ref, cbias_ref, wf1_ref, f1b_ref, wf2_ref,
                   v_ref, xpad_ref, br_ref, *, H, W, Cin, Cpad, pad_max):
    """One batch element per grid step: branch convs, pooling, attention, fuse."""
    HW = H * W
    Wp = W + 2 * pad_max

    # ---- padded input tile in VMEM (bf16): zero only the pad ring, then write
    #      the interior straight from the (already bf16) input block.
    zrow = jnp.zeros((pad_max, Wp, Cin), xpad_ref.dtype)
    xpad_ref[:pad_max, :, :] = zrow                       # top rows (full width)
    xpad_ref[pad_max + H:, :, :] = zrow                   # bottom rows (full width)
    zcol = jnp.zeros((H, pad_max, Cin), xpad_ref.dtype)
    xpad_ref[pad_max:pad_max + H, :pad_max, :] = zcol     # left strip
    xpad_ref[pad_max:pad_max + H, pad_max + W:, :] = zcol # right strip
    xpad_ref[pad_max:pad_max + H, pad_max:pad_max + W, :] = x_ref[0]

    # TODO(synk): pack xpad as (Hp, Wp*Cin) with pltpu.roll-based kw shifts (and/or
    # block several batch elements per grid step on v5e/v6e) to fill lanes when Cin < 128.

    # ---- M dilated grouped-conv branches ----
    # Grouped weights are densified block-diagonally and BN scale is folded in
    # (done once in the wrapper). bf16 operands, f32 accumulation on the MXU.
    s = jnp.zeros((1, Cpad), jnp.float32)                 # pooled sum, folded into the loop
    for m in range(M):
        dil = 1 + m
        off = pad_max - dil                               # align this dilation inside max pad

        def tap(kh, kw, _off=off, _dil=dil):
            r0 = _off + kh * _dil
            c0 = _off + kw * _dil
            # direct static ref slice of the padded scratch (no full-tile load)
            return xpad_ref[r0:r0 + H, c0:c0 + W, :].reshape(HW, Cin)

        if 3 * Cin >= 256:
            # Split the K = 9*Cin contraction over kh: 3 accumulating matmuls with
            # K = 3*Cin each, bounding the live im2col temp to one kernel row.
            acc = jnp.zeros((HW, Cpad), jnp.float32)
            for kh in range(3):
                patch = jnp.concatenate([tap(kh, kw) for kw in range(3)], axis=-1)
                w_kh = wconv_ref[m, kh * 3 * Cin:(kh + 1) * 3 * Cin, :]
                acc = acc + jnp.dot(patch, w_kh, preferred_element_type=jnp.float32)
        else:
            # Small Cin (e.g. the 32-channel test): one fused K = 9*Cin matmul.
            patch = jnp.concatenate(
                [tap(kh, kw) for kh in range(3) for kw in range(3)], axis=-1)
            acc = jnp.dot(patch, wconv_ref[m], preferred_element_type=jnp.float32)

        y = jnp.maximum(acc + cbias_ref[m:m + 1, :], 0.0)  # folded BN bias + ReLU (f32)
        br_ref[m] = y.astype(br_ref.dtype)                 # bf16 branch scratch
        s = s + jnp.sum(y, axis=0, keepdims=True)          # global-avg-pool numerator

    s = s * (1.0 / float(HW))                              # (1, Cpad) pooled features

    # ---- fc1 (BN folded) + ReLU -> fc2 -> softmax over the M branches ----
    # Tiny (1, d)/(1, Cpad) work; kept in f32.
    z = jnp.maximum(
        jnp.dot(s, wf1_ref[...], preferred_element_type=jnp.float32)
        + f1b_ref[...], 0.0)                                           # (1, d)
    logits = jnp.dot(z, wf2_ref[...],
                     preferred_element_type=jnp.float32)               # (1, M*Cpad)
    parts = [logits[:, m * Cpad:(m + 1) * Cpad] for m in range(M)]
    mx = parts[0]
    for p in parts[1:]:
        mx = jnp.maximum(mx, p)
    exps = [jnp.exp(p - mx) for p in parts]
    den = exps[0]
    for e in exps[1:]:
        den = den + e
    inv = pl.reciprocal(den, approx=True)                              # EUP, off the VALU path

    # ---- weighted fusion V = sum_m branch_m * a_m (bf16 loads, f32 math) ----
    v = br_ref[0] * (exps[0] * inv)
    for m in range(1, M):
        v = v + br_ref[m] * (exps[m] * inv)
    v_ref[0] = v.astype(v_ref.dtype)                                   # bf16 writeback


def skconv_forward(x_nchw, params):
    """SKConv forward. x_nchw: (B, Cin, H, W) float32. Returns (B, Cout, H, W) f32."""
    assert STRIDE == 1
    B, Cin, H, W = x_nchw.shape
    Cout = params["bn_gamma"].shape[1]
    d = params["fc1_w"].shape[0]
    Cpad = ((Cout + LANE - 1) // LANE) * LANE            # lane-dense output / matmul-N dim
    pad_max = M                                          # largest branch padding (= max dilation)
    Hp, Wp = H + 2 * pad_max, W + 2 * pad_max
    HW = H * W

    # NCHW -> NHWC, bf16 activations (f32 accumulation happens inside the kernel).
    # TODO(synk): accept/produce NHWC end-to-end to drop these two HBM transpose passes.
    x_nhwc = jnp.transpose(x_nchw, (0, 2, 3, 1)).astype(jnp.bfloat16)

    # Densify grouped conv weights into block-diagonal (9*Cin, Cout) per branch,
    # fold inference-mode BatchNorm scale into them, pad Cout -> Cpad, cast bf16.
    cout_g, cin_g = Cout // GROUPS, Cin // GROUPS
    w6 = params["conv_w"].reshape(M, GROUPS, cout_g, cin_g, 3, 3)     # (M,g,o,i,kh,kw)
    eye = jnp.eye(GROUPS, dtype=jnp.float32)
    wdense = jnp.einsum("mgoikl,gh->mklgiho", w6, eye).reshape(M, 3, 3, Cin, Cout)
    bn_scale = params["bn_gamma"] / jnp.sqrt(params["bn_var"] + BN_EPS)   # (M, Cout)
    bn_bias = params["bn_beta"] - params["bn_mean"] * bn_scale
    wdense = wdense * bn_scale[:, None, None, None, :]                    # fold BN scale
    wconv = jnp.pad(wdense, ((0, 0),) * 4 + ((0, Cpad - Cout),))
    wconv = wconv.reshape(M, 9 * Cin, Cpad).astype(jnp.bfloat16)          # (kh,kw,cin)-major rows
    cbias = jnp.pad(bn_bias, ((0, 0), (0, Cpad - Cout))).astype(jnp.float32)

    # fc1 / fc2 with fc1-BN folded; channel axes padded to Cpad. Kept f32 (tiny).
    f1_scale = params["fc1_gamma"] / jnp.sqrt(params["fc1_var"] + BN_EPS)  # (d,)
    f1_bias = (params["fc1_beta"] - params["fc1_mean"] * f1_scale).reshape(1, d)
    wf1 = params["fc1_w"].reshape(d, Cout).T * f1_scale[None, :]
    wf1 = jnp.pad(wf1, ((0, Cpad - Cout), (0, 0))).astype(jnp.float32)     # (Cpad, d)
    wf2 = params["fc2_w"].reshape(M, Cout, d)
    wf2 = jnp.pad(wf2, ((0, 0), (0, Cpad - Cout), (0, 0)))
    wf2 = jnp.transpose(wf2, (2, 0, 1)).reshape(d, M * Cpad).astype(jnp.float32)

    kern = functools.partial(_skconv_kernel, H=H, W=W, Cin=Cin, Cpad=Cpad,
                             pad_max=pad_max)

    # Derive the scoped-VMEM budget from the device (v7x only has 64 MiB physical).
    try:
        vmem_cap = int(pltpu.get_tpu_info().vmem_capacity_bytes)
    except Exception:
        vmem_cap = 128 * 1024 * 1024
    vmem_limit = int(min(96 * 1024 * 1024,
                         max(32 * 1024 * 1024, (vmem_cap * 3) // 4)))

    # TODO(synk): single-buffer the constant weight operands (pipeline_mode=pl.Buffered(1))
    # once verified on the target jax build; their index_maps are constant across the grid.
    # TODO(synk): add a spatial row-block (halo = pad_max) or Cout tile grid axis for very
    # large shapes so per-step scratch also fits v7x's 64 MiB VMEM with headroom.
    out = pl.pallas_call(
        kern,
        out_shape=jax.ShapeDtypeStruct((B, HW, Cpad), jnp.bfloat16),
        grid=(B,),
        in_specs=[
            pl.BlockSpec((1, H, W, Cin), lambda b: (b, 0, 0, 0)),     # unpadded NHWC tile (bf16)
            pl.BlockSpec((M, 9 * Cin, Cpad), lambda b: (0, 0, 0)),    # densified conv w (bf16, BN folded)
            pl.BlockSpec((M, Cpad), lambda b: (0, 0)),                # folded BN bias
            pl.BlockSpec((Cpad, d), lambda b: (0, 0)),                # fc1 weight (BN folded)
            pl.BlockSpec((1, d), lambda b: (0, 0)),                   # fc1 bias
            pl.BlockSpec((d, M * Cpad), lambda b: (0, 0)),            # fc2 weight
        ],
        out_specs=pl.BlockSpec((1, HW, Cpad), lambda b: (b, 0, 0)),
        scratch_shapes=[
            pltpu.VMEM((Hp, Wp, Cin), jnp.bfloat16),                  # zero-padded input tile
            pltpu.VMEM((M, HW, Cpad), jnp.bfloat16),                  # per-branch outputs
        ],
        compiler_params=pltpu.CompilerParams(
            dimension_semantics=("parallel",),                        # batch elems independent
            vmem_limit_bytes=vmem_limit,
        ),
    )(x_nhwc, wconv, cbias, wf1, f1_bias, wf2)

    # (B, H*W, Cpad) bf16 -> NCHW f32 (drop the lane padding; cast fused into this pass)
    out = out[:, :, :Cout].astype(jnp.float32).reshape(B, H, W, Cout)
    return out.transpose(0, 3, 1, 2)


def init_params(key, in_channels, out_channels):
    """Deterministic parameter init mirroring SKConv.__init__ shapes."""
    d = max(in_channels // R, L)
    k0, k1, k2 = jax.random.split(key, 3)
    fan_in = (in_channels // GROUPS) * 3 * 3
    conv_w = jax.random.normal(
        k0, (M, out_channels, in_channels // GROUPS, 3, 3), jnp.float32
    ) * jnp.sqrt(2.0 / fan_in)                                    # kaiming_normal_
    fc1_w = jax.random.normal(k1, (d, out_channels, 1, 1), jnp.float32) * 0.01
    fc2_w = jax.random.normal(k2, (out_channels * M, d, 1, 1), jnp.float32) * 0.01
    return dict(
        conv_w=conv_w,
        bn_gamma=jnp.ones((M, out_channels), jnp.float32),
        bn_beta=jnp.zeros((M, out_channels), jnp.float32),
        bn_mean=jnp.zeros((M, out_channels), jnp.float32),
        bn_var=jnp.ones((M, out_channels), jnp.float32),
        fc1_w=fc1_w,
        fc1_gamma=jnp.ones((d,), jnp.float32),
        fc1_beta=jnp.zeros((d,), jnp.float32),
        fc1_mean=jnp.zeros((d,), jnp.float32),
        fc1_var=jnp.ones((d,), jnp.float32),
        fc2_w=fc2_w,
    )


def skconv_reference(x_nchw, params):
    """Pure-JAX f32 reference (NCHW), inference-mode BatchNorm."""
    B, Cin, H, W = x_nchw.shape
    Cout = params["bn_gamma"].shape[1]
    d = params["fc1_w"].shape[0]
    outs = []
    for m in range(M):
        dil = 1 + m
        y = jax.lax.conv_general_dilated(
            x_nchw, params["conv_w"][m], window_strides=(STRIDE, STRIDE),
            padding=[(dil, dil), (dil, dil)], rhs_dilation=(dil, dil),
            dimension_numbers=("NCHW", "OIHW", "NCHW"),
            feature_group_count=GROUPS)
        scale = params["bn_gamma"][m] / jnp.sqrt(params["bn_var"][m] + BN_EPS)
        bias = params["bn_beta"][m] - params["bn_mean"][m] * scale
        y = jnp.maximum(y * scale[None, :, None, None] + bias[None, :, None, None], 0.0)
        outs.append(y)
    U = outs[0]
    for m in range(1, M):
        U = U + outs[m]
    s = jnp.mean(U, axis=(2, 3))                                   # (B, C)
    z = s @ params["fc1_w"].reshape(d, Cout).T
    f1_scale = params["fc1_gamma"] / jnp.sqrt(params["fc1_var"] + BN_EPS)
    f1_bias = params["fc1_beta"] - params["fc1_mean"] * f1_scale
    z = jnp.maximum(z * f1_scale[None, :] + f1_bias[None, :], 0.0)
    ab = z @ params["fc2_w"].reshape(M * Cout, d).T                # (B, M*C)
    ab = jax.nn.softmax(ab.reshape(B, M, Cout), axis=1)
    V = outs[0] * ab[:, 0, :][:, :, None, None]
    for m in range(1, M):
        V = V + outs[m] * ab[:, m, :][:, :, None, None]
    return V


def _check(x, params, tag):
    v = jax.block_until_ready(skconv_forward(x, params))
    assert v.shape == x.shape[:1] + (params["bn_gamma"].shape[1],) + x.shape[2:]
    v_ref = skconv_reference(x, params)
    # bf16 matmul operands / bf16 branch scratch / bf16 output (f32 accumulation)
    # -> compare with a loosened tolerance.
    if not bool(jnp.allclose(v, v_ref, rtol=5e-2, atol=5e-2)):
        err = float(jnp.max(jnp.abs(v - v_ref)))
        raise AssertionError(f"Pallas SKConv mismatch vs reference ({tag}), max abs err = {err}")


if __name__ == "__main__":
    key = jax.random.PRNGKey(0)
    kx, kp, kx2, kp2 = jax.random.split(key, 4)

    # Small shapes consistent with the module (channels divisible by groups=32).
    # Case 1: Cin=32 exercises the fused K=9*Cin path.
    B, Cin, Cout, H, W = 2, 32, 32, 8, 8
    x = jax.random.normal(kx, (B, Cin, H, W), jnp.float32)
    params = init_params(kp, Cin, Cout)
    _check(x, params, "fused")

    # Case 2: Cin=96 exercises the kh-split (3 accumulating matmuls) path.
    Cin2, Cout2 = 96, 32
    x2 = jax.random.normal(kx2, (B, Cin2, H, W), jnp.float32)
    params2 = init_params(kp2, Cin2, Cout2)
    _check(x2, params2, "kh-split")

    print("KERNEL_OK")
</pallas_src>

<mosaic_0001>
module attributes {stable_mosaic.version = 11 : i64} {
  func.func @_skconv_kernel(%arg0: i32, %arg1: memref<1x8x8x32xbf16, #tpu.memory_space<vmem>>, %arg2: memref<2x288x128xbf16, #tpu.memory_space<vmem>>, %arg3: memref<2x128xf32, #tpu.memory_space<vmem>>, %arg4: memref<128x32xf32, #tpu.memory_space<vmem>>, %arg5: memref<1x32xf32, #tpu.memory_space<vmem>>, %arg6: memref<32x256xf32, #tpu.memory_space<vmem>>, %arg7: memref<1x64x128xbf16, #tpu.memory_space<vmem>>, %arg8: memref<12x12x32xbf16, #tpu.memory_space<vmem>>, %arg9: memref<2x64x128xbf16, #tpu.memory_space<vmem>>) attributes {dimension_semantics = [#tpu.dimension_semantics<parallel>], iteration_bounds = array<i64: 2>, scalar_prefetch = 0 : i64, scratch_operands = 2 : i64, tpu.core_type = #tpu.core_type<tc>, window_params = [{transform_indices = @transform_0, window_bounds = array<i64: 1, 8, 8, 32>}, {pipeline_mode = #tpu.pipeline_mode<synchronous>, transform_indices = @transform_1, window_bounds = array<i64: 2, 288, 128>}, {pipeline_mode = #tpu.pipeline_mode<synchronous>, transform_indices = @transform_2, window_bounds = array<i64: 2, 128>}, {pipeline_mode = #tpu.pipeline_mode<synchronous>, transform_indices = @transform_3, window_bounds = array<i64: 128, 32>}, {pipeline_mode = #tpu.pipeline_mode<synchronous>, transform_indices = @transform_4, window_bounds = array<i64: 1, 32>}, {pipeline_mode = #tpu.pipeline_mode<synchronous>, transform_indices = @transform_5, window_bounds = array<i64: 32, 256>}, {transform_indices = @transform_6, window_bounds = array<i64: 1, 64, 128>}]} {
    %cst = arith.constant 0.000000e+00 : bf16
    %0 = vector.broadcast %cst : bf16 to vector<2x12x32xbf16>
    %c0 = arith.constant 0 : index
    %c0_0 = arith.constant 0 : index
    %c0_1 = arith.constant 0 : index
    %1 = vector.load %arg8[%c0, %c0_0, %c0_1] : memref<12x12x32xbf16, #tpu.memory_space<vmem>>, vector<2x12x32xbf16>
    tpu.vector_store %arg8[%c0, %c0_0, %c0_1], %0 {strides = array<i32>} : memref<12x12x32xbf16, #tpu.memory_space<vmem>>, vector<2x12x32xbf16>,
    %c10 = arith.constant 10 : index
    %c0_2 = arith.constant 0 : index
    %c0_3 = arith.constant 0 : index
    %2 = vector.load %arg8[%c10, %c0_2, %c0_3] : memref<12x12x32xbf16, #tpu.memory_space<vmem>>, vector<2x12x32xbf16>
    tpu.vector_store %arg8[%c10, %c0_2, %c0_3], %0 {strides = array<i32>} : memref<12x12x32xbf16, #tpu.memory_space<vmem>>, vector<2x12x32xbf16>,
    %cst_4 = arith.constant 0.000000e+00 : bf16
    %3 = vector.broadcast %cst_4 : bf16 to vector<8x2x32xbf16>
    %c2 = arith.constant 2 : index
    %c0_5 = arith.constant 0 : index
    %c0_6 = arith.constant 0 : index
    %4 = vector.load %arg8[%c2, %c0_5, %c0_6] : memref<12x12x32xbf16, #tpu.memory_space<vmem>>, vector<8x2x32xbf16>
    tpu.vector_store %arg8[%c2, %c0_5, %c0_6], %3 {strides = array<i32>} : memref<12x12x32xbf16, #tpu.memory_space<vmem>>, vector<8x2x32xbf16>,
    %c2_7 = arith.constant 2 : index
    %c10_8 = arith.constant 10 : index
    %c0_9 = arith.constant 0 : index
    %5 = vector.load %arg8[%c2_7, %c10_8, %c0_9] : memref<12x12x32xbf16, #tpu.memory_space<vmem>>, vector<8x2x32xbf16>
    tpu.vector_store %arg8[%c2_7, %c10_8, %c0_9], %3 {strides = array<i32>} : memref<12x12x32xbf16, #tpu.memory_space<vmem>>, vector<8x2x32xbf16>,
    %c0_10 = arith.constant 0 : index
    %c0_11 = arith.constant 0 : index
    %c0_12 = arith.constant 0 : index
    %c0_13 = arith.constant 0 : index
    %6 = vector.load %arg1[%c0_10, %c0_11, %c0_12, %c0_13] : memref<1x8x8x32xbf16, #tpu.memory_space<vmem>>, vector<1x8x8x32xbf16>
    %7 = vector.shape_cast %6 : vector<1x8x8x32xbf16> to vector<8x8x32xbf16>
    %c2_14 = arith.constant 2 : index
    %c2_15 = arith.constant 2 : index
    %c0_16 = arith.constant 0 : index
    %8 = vector.load %arg8[%c2_14, %c2_15, %c0_16] : memref<12x12x32xbf16, #tpu.memory_space<vmem>>, vector<8x8x32xbf16>
    tpu.vector_store %arg8[%c2_14, %c2_15, %c0_16], %7 {strides = array<i32>} : memref<12x12x32xbf16, #tpu.memory_space<vmem>>, vector<8x8x32xbf16>,
    %cst_17 = arith.constant 0.000000e+00 : f32
    %9 = vector.broadcast %cst_17 : f32 to vector<1x128xf32>
    %c1 = arith.constant 1 : index
    %c1_18 = arith.constant 1 : index
    %c0_19 = arith.constant 0 : index
    %10 = vector.load %arg8[%c1, %c1_18, %c0_19] : memref<12x12x32xbf16, #tpu.memory_space<vmem>>, vector<8x8x32xbf16>
    %11 = vector.shape_cast %10 : vector<8x8x32xbf16> to vector<64x32xbf16>
    %c1_20 = arith.constant 1 : index
    %c2_21 = arith.constant 2 : index
    %c0_22 = arith.constant 0 : index
    %12 = vector.load %arg8[%c1_20, %c2_21, %c0_22] : memref<12x12x32xbf16, #tpu.memory_space<vmem>>, vector<8x8x32xbf16>
    %13 = vector.shape_cast %12 : vector<8x8x32xbf16> to vector<64x32xbf16>
    %c1_23 = arith.constant 1 : index
    %c3 = arith.constant 3 : index
    %c0_24 = arith.constant 0 : index
    %14 = vector.load %arg8[%c1_23, %c3, %c0_24] : memref<12x12x32xbf16, #tpu.memory_space<vmem>>, vector<8x8x32xbf16>
    %15 = vector.shape_cast %14 : vector<8x8x32xbf16> to vector<64x32xbf16>
    %c2_25 = arith.constant 2 : index
    %c1_26 = arith.constant 1 : index
    %c0_27 = arith.constant 0 : index
    %16 = vector.load %arg8[%c2_25, %c1_26, %c0_27] : memref<12x12x32xbf16, #tpu.memory_space<vmem>>, vector<8x8x32xbf16>
    %17 = vector.shape_cast %16 : vector<8x8x32xbf16> to vector<64x32xbf16>
    %c2_28 = arith.constant 2 : index
    %c2_29 = arith.constant 2 : index
    %c0_30 = arith.constant 0 : index
    %18 = vector.load %arg8[%c2_28, %c2_29, %c0_30] : memref<12x12x32xbf16, #tpu.memory_space<vmem>>, vector<8x8x32xbf16>
    %19 = vector.shape_cast %18 : vector<8x8x32xbf16> to vector<64x32xbf16>
    %c2_31 = arith.constant 2 : index
    %c3_32 = arith.constant 3 : index
    %c0_33 = arith.constant 0 : index
    %20 = vector.load %arg8[%c2_31, %c3_32, %c0_33] : memref<12x12x32xbf16, #tpu.memory_space<vmem>>, vector<8x8x32xbf16>
    %21 = vector.shape_cast %20 : vector<8x8x32xbf16> to vector<64x32xbf16>
    %c3_34 = arith.constant 3 : index
    %c1_35 = arith.constant 1 : index
    %c0_36 = arith.constant 0 : index
    %22 = vector.load %arg8[%c3_34, %c1_35, %c0_36] : memref<12x12x32xbf16, #tpu.memory_space<vmem>>, vector<8x8x32xbf16>
    %23 = vector.shape_cast %22 : vector<8x8x32xbf16> to vector<64x32xbf16>
    %c3_37 = arith.constant 3 : index
    %c2_38 = arith.constant 2 : index
    %c0_39 = arith.constant 0 : index
    %24 = vector.load %arg8[%c3_37, %c2_38, %c0_39] : memref<12x12x32xbf16, #tpu.memory_space<vmem>>, vector<8x8x32xbf16>
    %25 = vector.shape_cast %24 : vector<8x8x32xbf16> to vector<64x32xbf16>
    %c3_40 = arith.constant 3 : index
    %c3_41 = arith.constant 3 : index
    %c0_42 = arith.constant 0 : index
    %26 = vector.load %arg8[%c3_40, %c3_41, %c0_42] : memref<12x12x32xbf16, #tpu.memory_space<vmem>>, vector<8x8x32xbf16>
    %27 = vector.shape_cast %26 : vector<8x8x32xbf16> to vector<64x32xbf16>
    %28 = tpu.concatenate %11, %13, %15, %17, %19, %21, %23, %25, %27 in 1 : vector<64x32xbf16>, vector<64x32xbf16>, vector<64x32xbf16>, vector<64x32xbf16>, vector<64x32xbf16>, vector<64x32xbf16>, vector<64x32xbf16>, vector<64x32xbf16>, vector<64x32xbf16> -> vector<64x288xbf16>
    %c0_43 = arith.constant 0 : index
    %c0_44 = arith.constant 0 : index
    %c0_45 = arith.constant 0 : index
    %29 = vector.load %arg2[%c0_43, %c0_44, %c0_45] : memref<2x288x128xbf16, #tpu.memory_space<vmem>>, vector<1x288x128xbf16>
    %30 = vector.shape_cast %29 : vector<1x288x128xbf16> to vector<288x128xbf16>
    %cst_46 = arith.constant dense<0.000000e+00> : vector<64x128xf32>
    %31 = tpu.matmul %28, %30, %cst_46 {dimension_numbers = #tpu.dot_dimension_numbers<[1], [0], [0], [1], [0, 0, 1, 1], [], []>} : vector<64x288xbf16>, vector<288x128xbf16>, vector<64x128xf32> -> vector<64x128xf32>
    %c0_47 = arith.constant 0 : index
    %c0_48 = arith.constant 0 : index
    %32 = vector.load %arg3[%c0_47, %c0_48] : memref<2x128xf32, #tpu.memory_space<vmem>>, vector<1x128xf32>
    %33 = vector.broadcast %32 : vector<1x128xf32> to vector<64x128xf32>
    %34 = arith.addf %31, %33 : vector<64x128xf32>
    %cst_49 = arith.constant 0.000000e+00 : f32
    %35 = vector.broadcast %cst_49 : f32 to vector<64x128xf32>
    %36 = arith.maximumf %34, %35 : vector<64x128xf32>
    %37 = arith.truncf %36 : vector<64x128xf32> to vector<64x128xbf16>
    %c0_50 = arith.constant 0 : index
    %c0_51 = arith.constant 0 : index
    %c0_52 = arith.constant 0 : index
    %38 = vector.load %arg9[%c0_50, %c0_51, %c0_52] : memref<2x64x128xbf16, #tpu.memory_space<vmem>>, vector<1x64x128xbf16>
    %39 = vector.shape_cast %38 : vector<1x64x128xbf16> to vector<64x128xbf16>
    %40 = vector.shape_cast %37 : vector<64x128xbf16> to vector<1x64x128xbf16>
    tpu.vector_store %arg9[%c0_50, %c0_51, %c0_52], %40 {strides = array<i32>} : memref<2x64x128xbf16, #tpu.memory_space<vmem>>, vector<1x64x128xbf16>,
    %cst_53 = arith.constant dense<0.000000e+00> : vector<128xf32>
    %41 = vector.multi_reduction <add>, %36, %cst_53 [0] : vector<64x128xf32> to vector<128xf32>
    %42 = vector.shape_cast %41 : vector<128xf32> to vector<1x128xf32>
    %43 = arith.addf %9, %42 : vector<1x128xf32>
    %c0_54 = arith.constant 0 : index
    %c0_55 = arith.constant 0 : index
    %c0_56 = arith.constant 0 : index
    %44 = vector.load %arg8[%c0_54, %c0_55, %c0_56] : memref<12x12x32xbf16, #tpu.memory_space<vmem>>, vector<8x8x32xbf16>
    %45 = vector.shape_cast %44 : vector<8x8x32xbf16> to vector<64x32xbf16>
    %c0_57 = arith.constant 0 : index
    %c2_58 = arith.constant 2 : index
    %c0_59 = arith.constant 0 : index
    %46 = vector.load %arg8[%c0_57, %c2_58, %c0_59] : memref<12x12x32xbf16, #tpu.memory_space<vmem>>, vector<8x8x32xbf16>
    %47 = vector.shape_cast %46 : vector<8x8x32xbf16> to vector<64x32xbf16>
    %c0_60 = arith.constant 0 : index
    %c4 = arith.constant 4 : index
    %c0_61 = arith.constant 0 : index
    %48 = vector.load %arg8[%c0_60, %c4, %c0_61] : memref<12x12x32xbf16, #tpu.memory_space<vmem>>, vector<8x8x32xbf16>
    %49 = vector.shape_cast %48 : vector<8x8x32xbf16> to vector<64x32xbf16>
    %c2_62 = arith.constant 2 : index
    %c0_63 = arith.constant 0 : index
    %c0_64 = arith.constant 0 : index
    %50 = vector.load %arg8[%c2_62, %c0_63, %c0_64] : memref<12x12x32xbf16, #tpu.memory_space<vmem>>, vector<8x8x32xbf16>
    %51 = vector.shape_cast %50 : vector<8x8x32xbf16> to vector<64x32xbf16>
    %c2_65 = arith.constant 2 : index
    %c2_66 = arith.constant 2 : index
    %c0_67 = arith.constant 0 : index
    %52 = vector.load %arg8[%c2_65, %c2_66, %c0_67] : memref<12x12x32xbf16, #tpu.memory_space<vmem>>, vector<8x8x32xbf16>
    %53 = vector.shape_cast %52 : vector<8x8x32xbf16> to vector<64x32xbf16>
    %c2_68 = arith.constant 2 : index
    %c4_69 = arith.constant 4 : index
    %c0_70 = arith.constant 0 : index
    %54 = vector.load %arg8[%c2_68, %c4_69, %c0_70] : memref<12x12x32xbf16, #tpu.memory_space<vmem>>, vector<8x8x32xbf16>
    %55 = vector.shape_cast %54 : vector<8x8x32xbf16> to vector<64x32xbf16>
    %c4_71 = arith.constant 4 : index
    %c0_72 = arith.constant 0 : index
    %c0_73 = arith.constant 0 : index
    %56 = vector.load %arg8[%c4_71, %c0_72, %c0_73] : memref<12x12x32xbf16, #tpu.memory_space<vmem>>, vector<8x8x32xbf16>
    %57 = vector.shape_cast %56 : vector<8x8x32xbf16> to vector<64x32xbf16>
    %c4_74 = arith.constant 4 : index
    %c2_75 = arith.constant 2 : index
    %c0_76 = arith.constant 0 : index
    %58 = vector.load %arg8[%c4_74, %c2_75, %c0_76] : memref<12x12x32xbf16, #tpu.memory_space<vmem>>, vector<8x8x32xbf16>
    %59 = vector.shape_cast %58 : vector<8x8x32xbf16> to vector<64x32xbf16>
    %c4_77 = arith.constant 4 : index
    %c4_78 = arith.constant 4 : index
    %c0_79 = arith.constant 0 : index
    %60 = vector.load %arg8[%c4_77, %c4_78, %c0_79] : memref<12x12x32xbf16, #tpu.memory_space<vmem>>, vector<8x8x32xbf16>
    %61 = vector.shape_cast %60 : vector<8x8x32xbf16> to vector<64x32xbf16>
    %62 = tpu.concatenate %45, %47, %49, %51, %53, %55, %57, %59, %61 in 1 : vector<64x32xbf16>, vector<64x32xbf16>, vector<64x32xbf16>, vector<64x32xbf16>, vector<64x32xbf16>, vector<64x32xbf16>, vector<64x32xbf16>, vector<64x32xbf16>, vector<64x32xbf16> -> vector<64x288xbf16>
    %c1_80 = arith.constant 1 : index
    %c0_81 = arith.constant 0 : index
    %c0_82 = arith.constant 0 : index
    %63 = vector.load %arg2[%c1_80, %c0_81, %c0_82] : memref<2x288x128xbf16, #tpu.memory_space<vmem>>, vector<1x288x128xbf16>
    %64 = vector.shape_cast %63 : vector<1x288x128xbf16> to vector<288x128xbf16>
    %cst_83 = arith.constant dense<0.000000e+00> : vector<64x128xf32>
    %65 = tpu.matmul %62, %64, %cst_83 {dimension_numbers = #tpu.dot_dimension_numbers<[1], [0], [0], [1], [0, 0, 1, 1], [], []>} : vector<64x288xbf16>, vector<288x128xbf16>, vector<64x128xf32> -> vector<64x128xf32>
    %c1_84 = arith.constant 1 : index
    %c0_85 = arith.constant 0 : index
    %66 = vector.load %arg3[%c1_84, %c0_85] : memref<2x128xf32, #tpu.memory_space<vmem>>, vector<1x128xf32>
    %67 = vector.broadcast %66 : vector<1x128xf32> to vector<64x128xf32>
    %68 = arith.addf %65, %67 : vector<64x128xf32>
    %cst_86 = arith.constant 0.000000e+00 : f32
    %69 = vector.broadcast %cst_86 : f32 to vector<64x128xf32>
    %70 = arith.maximumf %68, %69 : vector<64x128xf32>
    %71 = arith.truncf %70 : vector<64x128xf32> to vector<64x128xbf16>
    %c1_87 = arith.constant 1 : index
    %c0_88 = arith.constant 0 : index
    %c0_89 = arith.constant 0 : index
    %72 = vector.load %arg9[%c1_87, %c0_88, %c0_89] : memref<2x64x128xbf16, #tpu.memory_space<vmem>>, vector<1x64x128xbf16>
    %73 = vector.shape_cast %72 : vector<1x64x128xbf16> to vector<64x128xbf16>
    %74 = vector.shape_cast %71 : vector<64x128xbf16> to vector<1x64x128xbf16>
    tpu.vector_store %arg9[%c1_87, %c0_88, %c0_89], %74 {strides = array<i32>} : memref<2x64x128xbf16, #tpu.memory_space<vmem>>, vector<1x64x128xbf16>,
    %cst_90 = arith.constant dense<0.000000e+00> : vector<128xf32>
    %75 = vector.multi_reduction <add>, %70, %cst_90 [0] : vector<64x128xf32> to vector<128xf32>
    %76 = vector.shape_cast %75 : vector<128xf32> to vector<1x128xf32>
    %77 = arith.addf %43, %76 : vector<1x128xf32>
    %cst_91 = arith.constant 1.562500e-02 : f32
    %78 = vector.broadcast %cst_91 : f32 to vector<1x128xf32>
    %79 = arith.mulf %77, %78 : vector<1x128xf32>
    %c0_92 = arith.constant 0 : index
    %c0_93 = arith.constant 0 : index
    %80 = vector.load %arg4[%c0_92, %c0_93] : memref<128x32xf32, #tpu.memory_space<vmem>>, vector<128x32xf32>
    %cst_94 = arith.constant dense<0.000000e+00> : vector<1x32xf32>
    %81 = tpu.matmul %79, %80, %cst_94 {dimension_numbers = #tpu.dot_dimension_numbers<[1], [0], [0], [1], [0, 0, 1, 1], [], []>} : vector<1x128xf32>, vector<128x32xf32>, vector<1x32xf32> -> vector<1x32xf32>
    %c0_95 = arith.constant 0 : index
    %c0_96 = arith.constant 0 : index
    %82 = vector.load %arg5[%c0_95, %c0_96] : memref<1x32xf32, #tpu.memory_space<vmem>>, vector<1x32xf32>
    %83 = arith.addf %81, %82 : vector<1x32xf32>
    %cst_97 = arith.constant 0.000000e+00 : f32
    %84 = vector.broadcast %cst_97 : f32 to vector<1x32xf32>
    %85 = arith.maximumf %83, %84 : vector<1x32xf32>
    %c0_98 = arith.constant 0 : index
    %c0_99 = arith.constant 0 : index
    %86 = vector.load %arg6[%c0_98, %c0_99] : memref<32x256xf32, #tpu.memory_space<vmem>>, vector<32x256xf32>
    %cst_100 = arith.constant dense<0.000000e+00> : vector<1x256xf32>
    %87 = tpu.matmul %85, %86, %cst_100 {dimension_numbers = #tpu.dot_dimension_numbers<[1], [0], [0], [1], [0, 0, 1, 1], [], []>} : vector<1x32xf32>, vector<32x256xf32>, vector<1x256xf32> -> vector<1x256xf32>
    %88 = vector.extract_strided_slice %87 {offsets = [0, 0], sizes = [1, 128], strides = [1, 1]} : vector<1x256xf32> to vector<1x128xf32>
    %89 = vector.extract_strided_slice %87 {offsets = [0, 128], sizes = [1, 128], strides = [1, 1]} : vector<1x256xf32> to vector<1x128xf32>
    %90 = arith.maximumf %88, %89 : vector<1x128xf32>
    %91 = arith.subf %88, %90 : vector<1x128xf32>
    %92 = math.exp %91 : vector<1x128xf32>
    %93 = arith.subf %89, %90 : vector<1x128xf32>
    %94 = math.exp %93 : vector<1x128xf32>
    %95 = arith.addf %92, %94 : vector<1x128xf32>
    %96 = tpu.reciprocal %95 {approx = true} : vector<1x128xf32> -> vector<1x128xf32>
    %c0_101 = arith.constant 0 : index
    %c0_102 = arith.constant 0 : index
    %c0_103 = arith.constant 0 : index
    %97 = vector.load %arg9[%c0_101, %c0_102, %c0_103] : memref<2x64x128xbf16, #tpu.memory_space<vmem>>, vector<1x64x128xbf16>
    %98 = vector.shape_cast %97 : vector<1x64x128xbf16> to vector<64x128xbf16>
    %99 = arith.mulf %92, %96 : vector<1x128xf32>
    %100 = arith.extf %98 : vector<64x128xbf16> to vector<64x128xf32>
    %101 = vector.broadcast %99 : vector<1x128xf32> to vector<64x128xf32>
    %102 = arith.mulf %100, %101 : vector<64x128xf32>
    %c1_104 = arith.constant 1 : index
    %c0_105 = arith.constant 0 : index
    %c0_106 = arith.constant 0 : index
    %103 = vector.load %arg9[%c1_104, %c0_105, %c0_106] : memref<2x64x128xbf16, #tpu.memory_space<vmem>>, vector<1x64x128xbf16>
    %104 = vector.shape_cast %103 : vector<1x64x128xbf16> to vector<64x128xbf16>
    %105 = arith.mulf %94, %96 : vector<1x128xf32>
    %106 = arith.extf %104 : vector<64x128xbf16> to vector<64x128xf32>
    %107 = vector.broadcast %105 : vector<1x128xf32> to vector<64x128xf32>
    %108 = arith.mulf %106, %107 : vector<64x128xf32>
    %109 = arith.addf %102, %108 : vector<64x128xf32>
    %110 = arith.truncf %109 : vector<64x128xf32> to vector<64x128xbf16>
    %c0_107 = arith.constant 0 : index
    %c0_108 = arith.constant 0 : index
    %c0_109 = arith.constant 0 : index
    %111 = vector.load %arg7[%c0_107, %c0_108, %c0_109] : memref<1x64x128xbf16, #tpu.memory_space<vmem>>, vector<1x64x128xbf16>
    %112 = vector.shape_cast %111 : vector<1x64x128xbf16> to vector<64x128xbf16>
    %113 = vector.shape_cast %110 : vector<64x128xbf16> to vector<1x64x128xbf16>
    tpu.vector_store %arg7[%c0_107, %c0_108, %c0_109], %113 {strides = array<i32>} : memref<1x64x128xbf16, #tpu.memory_space<vmem>>, vector<1x64x128xbf16>,
    return
  }
  func.func @transform_0(%arg0: i32) -> (i32, i32, i32, i32) {
    %c0_i32 = arith.constant 0 : i32
    %c0_i32_0 = arith.constant 0 : i32
    %c0_i32_1 = arith.constant 0 : i32
    %c0_i32_2 = arith.constant 0 : i32
    return %arg0, %c0_i32, %c0_i32_0, %c0_i32_1 : i32, i32, i32, i32
  }
  func.func @transform_1(%arg0: i32) -> (i32, i32, i32) {
    %c0_i32 = arith.constant 0 : i32
    %c0_i32_0 = arith.constant 0 : i32
    %c0_i32_1 = arith.constant 0 : i32
    %c0_i32_2 = arith.constant 0 : i32
    return %c0_i32, %c0_i32_0, %c0_i32_1 : i32, i32, i32
  }
  func.func @transform_2(%arg0: i32) -> (i32, i32) {
    %c0_i32 = arith.constant 0 : i32
    %c0_i32_0 = arith.constant 0 : i32
    %c0_i32_1 = arith.constant 0 : i32
    return %c0_i32, %c0_i32_0 : i32, i32
  }
  func.func @transform_3(%arg0: i32) -> (i32, i32) {
    %c0_i32 = arith.constant 0 : i32
    %c0_i32_0 = arith.constant 0 : i32
    %c0_i32_1 = arith.constant 0 : i32
    return %c0_i32, %c0_i32_0 : i32, i32
  }
  func.func @transform_4(%arg0: i32) -> (i32, i32) {
    %c0_i32 = arith.constant 0 : i32
    %c0_i32_0 = arith.constant 0 : i32
    %c0_i32_1 = arith.constant 0 : i32
    return %c0_i32, %c0_i32_0 : i32, i32
  }
  func.func @transform_5(%arg0: i32) -> (i32, i32) {
    %c0_i32 = arith.constant 0 : i32
    %c0_i32_0 = arith.constant 0 : i32
    %c0_i32_1 = arith.constant 0 : i32
    return %c0_i32, %c0_i32_0 : i32, i32
  }
  func.func @transform_6(%arg0: i32) -> (i32, i32, i32) {
    %c0_i32 = arith.constant 0 : i32
    %c0_i32_0 = arith.constant 0 : i32
    %c0_i32_1 = arith.constant 0 : i32
    return %arg0, %c0_i32, %c0_i32_0 : i32, i32, i32
  }
}

</mosaic_0001>

<llo_original>
// kernel: tpu_custom_call.1
$region0: #{tpu_custom_call.1}
  #allocation0 [shape = 'u32[]', space=smem, size = 0x4, offset = 0x4, fixed_abs, tag = 'smem constant byte address 0x4 - core index']
  #allocation1 [shape = 'u32[72,128]{1,0:T(1,128)}', space=vmem, size = 0x9000, scoped, tag = 'internal scratch']
  #allocation2 [shape = 'bf16[12,12,32]{2,1,0:T(8,128)(2,1)}', space=vmem, size = 0xc000, scoped, tag = 'scratch operand']
  #allocation3 [shape = 'bf16[2,64,128]{2,1,0:T(8,128)(2,1)}', space=vmem, size = 0x8000, scoped, tag = 'scratch operand']
  %s0 = inlined_call_operand.vmem [shape: bf16[2,8,8,32], index: 0, kind: input, shape index: {}]
  %s1 = inlined_call_operand.hbm [shape: bf16[2,288,128], index: 1, kind: input, shape index: {}]
  %s2 = inlined_call_operand.vmem [shape: f32[2,128], index: 2, kind: input, shape index: {}]
  %s3 = inlined_call_operand.vmem [shape: f32[128,32], index: 3, kind: input, shape index: {}]
  %s4 = inlined_call_operand.vmem [shape: f32[1,32], index: 4, kind: input, shape index: {}]
  %s5 = inlined_call_operand.vmem [shape: f32[32,256], index: 5, kind: input, shape index: {}]
  %s6 = inlined_call_operand.hbm [shape: bf16[2,64,128], index: 6, kind: output, shape index: {}]
  %s7 = sld [smem:[#allocation0]]
  $region61: #{tpu_custom_call.1} parent=0
    _
  %s9 = ssub.s32 1, %s7
  %s10 = scalar_select 0, %s9, %s7
  $region1: #{tpu_custom_call.1} parent=0
    #allocation4 [shape = 'u8[147456]{0}', space=vmem, size = 0x24000, scoped, tag = 'input window, operand 1, single buffered']
    #allocation5 [shape = 's32[2]{0}', space=sflag, size = 0x8, scoped, tag = 'scoped memory for tpu_custom_call.1']
    #allocation6 [shape = 's32[2]{0}', space=sflag, size = 0x8, scoped, tag = 'scoped memory for tpu_custom_call.1']
    #allocation7 [shape = 'u8[32768]{0}', space=vmem, size = 0x8000, scoped, tag = 'output window, operand 0']
    %11 = vsyncpa [#allocation5], 0
    %12 = vsyncpa [#allocation6], 0
    %s13 = scalar_lea.sflag [#allocation6], 1
    %14 = vsyncpa %s13, 0
    loop: start=0, step=1, limit=4
    $region2: #{tpu_custom_call.1} parent=1 // loop_pre_header
      _
    $region3: #{tpu_custom_call.1} parent=1 // loop_header
      %s16 = sphi 0, %s20
      %p17 = scmp.ge.s32.totalorder %s16, 4
      %s26 = sphi 0, %s28
      %s29 = sphi 0, %s26
      %s30 = sphi 0, %s29
      %s46 = sphi 0, %s30
      %s50 = sphi 0, %s50
      %s52 = sphi 0, %s50
      %s53 = sphi 0, %s52
      %s67 = sphi 0, %s53
      %s71 = sphi 0, %s71
      %s73 = sphi 0, %s71
      %s74 = sphi 0, %s73
      %s88 = sphi 0, %s74
      %s92 = sphi 0, %s92
      %s94 = sphi 0, %s92
      %s95 = sphi 0, %s94
      %s109 = sphi 0, %s95
      %s113 = sphi 0, %s113
      %s115 = sphi 0, %s113
      %s116 = sphi 0, %s115
      %s130 = sphi 0, %s116
      %s134 = sphi 0, %s134
      %s136 = sphi 0, %s134
      %s137 = sphi 0, %s136
      %s151 = sphi 0, %s137
      %s157 = sphi 0, %s159
      %s160 = sphi 0, %s157
      %s161 = sphi 0, %s160
      %s177 = sphi 0, %s161
    $region4: #{tpu_custom_call.1} parent=1 // loop_header_branch
      %19 = sbr.rel (%p17) target = $region8
    $region5: #{tpu_custom_call.1} parent=1 // loop_body
      %s21 = ssub.s32 %s16, 1
      %s22 = ssub.s32 %s16, 2
      %s23 = sadd.s32 %s16, 1
      %s24 = ssub.s32 %s16, %s23
      %p25 = scmp.eq.s32.totalorder %s24, 0
      %s27 = sadd.s32 %s26, 1
      %s28 = scalar_select %p25, %s26, %s27
      %p31 = pneg %p25
      %p32 = scmp.eq.s32.totalorder %s16, 1
      %p33 = por %p31, %p32
      %p34 = scmp.ne.s32.totalorder %s26, %s29
      %p35 = scmp.eq.s32.totalorder %s16, 0
      %p36 = por %p34, %p35
      %p37 = scmp.ne.s32.totalorder %s26, %s29
      %p38 = scmp.eq.s32.totalorder %s21, 1
      %p39 = por %p37, %p38
      %p40 = scmp.ne.s32.totalorder %s29, %s30
      %p41 = scmp.eq.s32.totalorder %s21, 0
      %p42 = por %p40, %p41
      %p43 = scmp.ne.s32.totalorder %s29, %s30
      %p44 = scmp.eq.s32.totalorder %s22, 1
      %p45 = por %p43, %p44
      %p47 = scmp.ne.s32.totalorder %s30, %s46
      %p48 = scmp.eq.s32.totalorder %s22, 0
      %p49 = por %p47, %p48
      %s51 = sadd.s32 %s50, 1
      %p54 = scmp.eq.s32.totalorder %s16, 1
      %p55 = scmp.ne.s32.totalorder %s50, %s52
      %p56 = scmp.eq.s32.totalorder %s16, 0
      %p57 = por %p55, %p56
      %p58 = scmp.ne.s32.totalorder %s50, %s52
      %p59 = scmp.eq.s32.totalorder %s21, 1
      %p60 = por %p58, %p59
      %p61 = scmp.ne.s32.totalorder %s52, %s53
      %p62 = scmp.eq.s32.totalorder %s21, 0
      %p63 = por %p61, %p62
      %p64 = scmp.ne.s32.totalorder %s52, %s53
      %p65 = scmp.eq.s32.totalorder %s22, 1
      %p66 = por %p64, %p65
      %p68 = scmp.ne.s32.totalorder %s53, %s67
      %p69 = scmp.eq.s32.totalorder %s22, 0
      %p70 = por %p68, %p69
      %s72 = sadd.s32 %s71, 1
      %p75 = scmp.eq.s32.totalorder %s16, 1
      %p76 = scmp.ne.s32.totalorder %s71, %s73
      %p77 = scmp.eq.s32.totalorder %s16, 0
      %p78 = por %p76, %p77
      %p79 = scmp.ne.s32.totalorder %s71, %s73
      %p80 = scmp.eq.s32.totalorder %s21, 1
      %p81 = por %p79, %p80
      %p82 = scmp.ne.s32.totalorder %s73, %s74
      %p83 = scmp.eq.s32.totalorder %s21, 0
      %p84 = por %p82, %p83
      %p85 = scmp.ne.s32.totalorder %s73, %s74
      %p86 = scmp.eq.s32.totalorder %s22, 1
      %p87 = por %p85, %p86
      %p89 = scmp.ne.s32.totalorder %s74, %s88
      %p90 = scmp.eq.s32.totalorder %s22, 0
      %p91 = por %p89, %p90
      %s93 = sadd.s32 %s92, 1
      %p96 = scmp.eq.s32.totalorder %s16, 1
      %p97 = scmp.ne.s32.totalorder %s92, %s94
      %p98 = scmp.eq.s32.totalorder %s16, 0
      %p99 = por %p97, %p98
      %p100 = scmp.ne.s32.totalorder %s92, %s94
      %p101 = scmp.eq.s32.totalorder %s21, 1
      %p102 = por %p100, %p101
      %p103 = scmp.ne.s32.totalorder %s94, %s95
      %p104 = scmp.eq.s32.totalorder %s21, 0
      %p105 = por %p103, %p104
      %p106 = scmp.ne.s32.totalorder %s94, %s95
      %p107 = scmp.eq.s32.totalorder %s22, 1
      %p108 = por %p106, %p107
      %p110 = scmp.ne.s32.totalorder %s95, %s109
      %p111 = scmp.eq.s32.totalorder %s22, 0
      %p112 = por %p110, %p111
      %s114 = sadd.s32 %s113, 1
      %p117 = scmp.eq.s32.totalorder %s16, 1
      %p118 = scmp.ne.s32.totalorder %s113, %s115
      %p119 = scmp.eq.s32.totalorder %s16, 0
      %p120 = por %p118, %p119
      %p121 = scmp.ne.s32.totalorder %s113, %s115
      %p122 = scmp.eq.s32.totalorder %s21, 1
      %p123 = por %p121, %p122
      %p124 = scmp.ne.s32.totalorder %s115, %s116
      %p125 = scmp.eq.s32.totalorder %s21, 0
      %p126 = por %p124, %p125
      %p127 = scmp.ne.s32.totalorder %s115, %s116
      %p128 = scmp.eq.s32.totalorder %s22, 1
      %p129 = por %p127, %p128
      %p131 = scmp.ne.s32.totalorder %s116, %s130
      %p132 = scmp.eq.s32.totalorder %s22, 0
      %p133 = por %p131, %p132
      %s135 = sadd.s32 %s134, 1
      %p138 = scmp.eq.s32.totalorder %s16, 1
      %p139 = scmp.ne.s32.totalorder %s134, %s136
      %p140 = scmp.eq.s32.totalorder %s16, 0
      %p141 = por %p139, %p140
      %p142 = scmp.ne.s32.totalorder %s134, %s136
      %p143 = scmp.eq.s32.totalorder %s21, 1
      %p144 = por %p142, %p143
      %p145 = scmp.ne.s32.totalorder %s136, %s137
      %p146 = scmp.eq.s32.totalorder %s21, 0
      %p147 = por %p145, %p146
      %p148 = scmp.ne.s32.totalorder %s136, %s137
      %p149 = scmp.eq.s32.totalorder %s22, 1
      %p150 = por %p148, %p149
      %p152 = scmp.ne.s32.totalorder %s137, %s151
      %p153 = scmp.eq.s32.totalorder %s22, 0
      %p154 = por %p152, %p153
      %s155 = ssub.s32 %s16, %s23
      %p156 = scmp.eq.s32.totalorder %s155, 0
      %s158 = sadd.s32 %s157, 1
      %s159 = scalar_select %p156, %s157, %s158
      %p162 = pneg %p156
      %p163 = scmp.eq.s32.totalorder %s16, 1
      %p164 = por %p162, %p163
      %p165 = scmp.ne.s32.totalorder %s157, %s160
      %p166 = scmp.eq.s32.totalorder %s16, 0
      %p167 = por %p165, %p166
      %p168 = scmp.ne.s32.totalorder %s157, %s160
      %p169 = scmp.eq.s32.totalorder %s21, 1
      %p170 = por %p168, %p169
      %p171 = scmp.ne.s32.totalorder %s160, %s161
      %p172 = scmp.eq.s32.totalorder %s21, 0
      %p173 = por %p171, %p172
      %p174 = scmp.ne.s32.totalorder %s160, %s161
      %p175 = scmp.eq.s32.totalorder %s22, 1
      %p176 = por %p174, %p175
      %p178 = scmp.ne.s32.totalorder %s161, %s177
      %p179 = scmp.eq.s32.totalorder %s22, 0
      %p180 = por %p178, %p179
      %p181 = scmp.le.s32.totalorder 1, %s16
      %p182 = scmp.lt.s32.totalorder %s16, 3
      %p183 = pnand %p181, %p182
      %p184 = pneg %p183
      // Predicated region
      $region9: #{tpu_custom_call.1} parent=5 // pred_check
        _
      $region10: #{tpu_custom_call.1} parent=5 // pred_check_branch
        %186 = sbr.rel (%p183) target = $region12
      $region11: #{tpu_custom_call.1} parent=5 // pred_region
        %s187 = ssub.s32 %s16, 1
        // Predicated region
        $region13: #{tpu_custom_call.1} parent=11 // pred_check
          %p188 = pneg %p63
        $region14: #{tpu_custom_call.1} parent=11 // pred_check_branch
          %190 = sbr.rel (%p188) target = $region16
        $region15: #{tpu_custom_call.1} parent=11 // pred_region
          %192 = vsyncadd [#allocation5], 0
          %s193 = sshll.u32 %s1, 4
          %s194 = int_to_ptr.hbm [resolvable:$true] %s193
          %s195 = sshll.u32 [#allocation4], 4
          %s196 = int_to_ptr.vmem [resolvable:$true] %s195
          %201 = dma.hbm_to_vmem [thread:$0]  %s194, 4608, %s196, [#allocation5], 64, 64, 4
        $region16: #{tpu_custom_call.1} parent=11 // pred_fallthru
          _
        // Predicated region
        $region17: #{tpu_custom_call.1} parent=11 // pred_check
          %p202 = pneg %p84
        $region18: #{tpu_custom_call.1} parent=11 // pred_check_branch
          %204 = sbr.rel (%p202) target = $region20
        $region19: #{tpu_custom_call.1} parent=11 // pred_region
          _
        $region20: #{tpu_custom_call.1} parent=11 // pred_fallthru
          _
        // Predicated region
        $region21: #{tpu_custom_call.1} parent=11 // pred_check
          %p205 = pneg %p105
        $region22: #{tpu_custom_call.1} parent=11 // pred_check_branch
          %207 = sbr.rel (%p205) target = $region24
        $region23: #{tpu_custom_call.1} parent=11 // pred_region
          _
        $region24: #{tpu_custom_call.1} parent=11 // pred_fallthru
          _
        // Predicated region
        $region25: #{tpu_custom_call.1} parent=11 // pred_check
          %p208 = pneg %p126
        $region26: #{tpu_custom_call.1} parent=11 // pred_check_branch
          %210 = sbr.rel (%p208) target = $region28
        $region27: #{tpu_custom_call.1} parent=11 // pred_region
          _
        $region28: #{tpu_custom_call.1} parent=11 // pred_fallthru
          _
        // Predicated region
        $region29: #{tpu_custom_call.1} parent=11 // pred_check
          %p211 = pneg %p147
        $region30: #{tpu_custom_call.1} parent=11 // pred_check_branch
          %213 = sbr.rel (%p211) target = $region32
        $region31: #{tpu_custom_call.1} parent=11 // pred_region
          _
        $region32: #{tpu_custom_call.1} parent=11 // pred_fallthru
          _
      $region12: #{tpu_custom_call.1} parent=5 // pred_fallthru
        _
      %p214 = scmp.lt.s32.totalorder %s16, 2
      // Predicated region
      $region33: #{tpu_custom_call.1} parent=5 // pred_check
        %p215 = pneg %p214
      $region34: #{tpu_custom_call.1} parent=5 // pred_check_branch
        %217 = sbr.rel (%p215) target = $region36
      $region35: #{tpu_custom_call.1} parent=5 // pred_region
        // Predicated region
        $region37: #{tpu_custom_call.1} parent=35 // pred_check
          %p218 = pneg %p36
        $region38: #{tpu_custom_call.1} parent=35 // pred_check_branch
          %220 = sbr.rel (%p218) target = $region40
        $region39: #{tpu_custom_call.1} parent=35 // pred_region
          %p221 = scmp.lt.s32.totalorder %s16, 1
          %s222 = scalar_select %p221, %s16, 1
          %s223 = smul.addr %s222, 8
          %s224 = smul.addr %s223, 4
          %s225 = scalar_lea.vmem %s0, %s224
        $region40: #{tpu_custom_call.1} parent=35 // pred_fallthru
          _
      $region36: #{tpu_custom_call.1} parent=5 // pred_fallthru
        _
      %p226 = scmp.le.s32.totalorder 1, %s16
      %p227 = scmp.lt.s32.totalorder %s16, 3
      %p228 = pnand %p226, %p227
      %p229 = pneg %p228
      // Predicated region
      $region41: #{tpu_custom_call.1} parent=5 // pred_check
        _
      $region42: #{tpu_custom_call.1} parent=5 // pred_check_branch
        %231 = sbr.rel (%p228) target = $region44
      $region43: #{tpu_custom_call.1} parent=5 // pred_region
        %s232 = ssub.s32 %s16, 1
        // Predicated region
        $region45: #{tpu_custom_call.1} parent=43 // pred_check
          %p233 = pneg %p63
        $region46: #{tpu_custom_call.1} parent=43 // pred_check_branch
          %235 = sbr.rel (%p233) target = $region48
        $region47: #{tpu_custom_call.1} parent=43 // pred_region
          %237 = dma.done [#allocation5], 4608
        $region48: #{tpu_custom_call.1} parent=43 // pred_fallthru
          _
        %p238 = scmp.lt.s32.totalorder %s21, 1
        %s239 = scalar_select %p238, %s21, 1
        %s240 = smul.addr %s239, 8
        %s241 = smul.addr %s240, 4
        %s242 = scalar_lea.vmem %s0, %s241
        %p243 = pneg %p42
        %p244 = pneg %p39
        %p245 = pneg %p63
        %p246 = pneg %p60
        %p247 = pneg %p84
        %p248 = pneg %p81
        %p249 = pneg %p105
        %p250 = pneg %p102
        %p251 = pneg %p126
        %p252 = pneg %p123
        %p253 = pneg %p147
        %p254 = pneg %p144
        %p255 = pneg %p173
        %p256 = pneg %p170
        %s257 = sand.u32 %s160, 1
        %s258 = scalar_lea.sflag [#allocation6], %s257
        %s259 = sand.u32 %s160, 1
        %s260 = smul.addr %s259, 32
        %s261 = scalar_lea.vmem [#allocation7], %s260
        %p262 = scmp.lt.s32.totalorder %s21, 1
        %s263 = scalar_select %p262, %s21, 1
        %s264 = smul.addr %s263, 8
        %s265 = smul.addr %s264, 4
        %s266 = scalar_lea.vmem %s0, %s265
        %vm268 = vcmask 257024
        %269 = vst.msk [vmem:[#allocation2] sm:$0xf] %vm268, 0
        %vm270 = vcmask 254976
        %271 = vst.msk [vmem:[#allocation2 + $0x4] sm:$0x3] %vm270, 0
        %272 = vst.msk [vmem:[#allocation2 + $0x8] sm:$0xf] %vm268, 0
        %273 = vst.msk [vmem:[#allocation2 + $0xc] sm:$0x3] %vm270, 0
        %s274 = scalar_lea.vmem [#allocation2], 80
        %275 = vst.msk [vmem:[%s274] sm:$0xf] %vm268, 0
        %276 = vst.msk [vmem:[%s274 + $0x4] sm:$0x3] %vm270, 0
        %277 = vst.msk [vmem:[%s274 + $0x8] sm:$0xf] %vm268, 0
        %278 = vst.msk [vmem:[%s274 + $0xc] sm:$0x3] %vm270, 0
        %s279 = scalar_lea.vmem [#allocation2], 16
        %vm280 = vcmask 253952
        %281 = vst.msk [vmem:[%s279] sm:$0x1] %vm280, 0
        %282 = vst.msk [vmem:[%s279 + $0x8] sm:$0x1] %vm280, 0
        %283 = vst.msk [vmem:[%s279 + $0x10] sm:$0x1] %vm280, 0
        %284 = vst.msk [vmem:[%s279 + $0x18] sm:$0x1] %vm280, 0
        %285 = vst.msk [vmem:[%s279 + $0x20] sm:$0x1] %vm280, 0
        %286 = vst.msk [vmem:[%s279 + $0x28] sm:$0x1] %vm280, 0
        %287 = vst.msk [vmem:[%s279 + $0x30] sm:$0x1] %vm280, 0
        %288 = vst.msk [vmem:[%s279 + $0x38] sm:$0x1] %vm280, 0
        %vm289 = vcmask 254977
        %290 = vst.msk [vmem:[%s279 + $0x4] sm:$0x2] %vm289, 0
        %291 = vst.msk [vmem:[%s279 + $0xc] sm:$0x2] %vm289, 0
        %292 = vst.msk [vmem:[%s279 + $0x14] sm:$0x2] %vm289, 0
        %293 = vst.msk [vmem:[%s279 + $0x1c] sm:$0x2] %vm289, 0
        %294 = vst.msk [vmem:[%s279 + $0x24] sm:$0x2] %vm289, 0
        %295 = vst.msk [vmem:[%s279 + $0x2c] sm:$0x2] %vm289, 0
        %296 = vst.msk [vmem:[%s279 + $0x34] sm:$0x2] %vm289, 0
        %297 = vst.msk [vmem:[%s279 + $0x3c] sm:$0x2] %vm289, 0
        %v298 = vld [vmem:[%s266] sm:$0xf]
        %v299 = vld [vmem:[%s266 + $0x4] sm:$0xf]
        %v300 = vld [vmem:[%s266 + $0x8] sm:$0xf]
        %v301 = vld [vmem:[%s266 + $0xc] sm:$0xf]
        %v302 = vld [vmem:[%s266 + $0x10] sm:$0xf]
        %v303 = vld [vmem:[%s266 + $0x14] sm:$0xf]
        %v304 = vld [vmem:[%s266 + $0x18] sm:$0xf]
        %v305 = vld [vmem:[%s266 + $0x1c] sm:$0xf]
        %v314 = vrot.slane %v298, 7
        %v315 = vrot.slane %v314, 4
        %v316 = vrot.slane %v299, 7
        %v317 = vrot.slane %v316, 4
        %v318 = vrot.slane %v300, 7
        %v319 = vrot.slane %v318, 4
        %v320 = vrot.slane %v301, 7
        %v321 = vrot.slane %v320, 4
        %v322 = vrot.slane %v302, 7
        %v323 = vrot.slane %v322, 4
        %v324 = vrot.slane %v303, 7
        %v325 = vrot.slane %v324, 4
        %v326 = vrot.slane %v304, 7
        %v327 = vrot.slane %v326, 4
        %v328 = vrot.slane %v305, 7
        %v329 = vrot.slane %v328, 4
        %vm346 = vcmask 257025
        %347 = vst.msk [vmem:[%s279] sm:$0xe] %vm346, %v314
        %348 = vst.msk [vmem:[%s279 + $0x4] sm:$0x1] %vm280, %v315
        %349 = vst.msk [vmem:[%s279 + $0x8] sm:$0xe] %vm346, %v316
        %350 = vst.msk [vmem:[%s279 + $0xc] sm:$0x1] %vm280, %v317
        %351 = vst.msk [vmem:[%s279 + $0x10] sm:$0xe] %vm346, %v318
        %352 = vst.msk [vmem:[%s279 + $0x14] sm:$0x1] %vm280, %v319
        %353 = vst.msk [vmem:[%s279 + $0x18] sm:$0xe] %vm346, %v320
        %354 = vst.msk [vmem:[%s279 + $0x1c] sm:$0x1] %vm280, %v321
        %355 = vst.msk [vmem:[%s279 + $0x20] sm:$0xe] %vm346, %v322
        %356 = vst.msk [vmem:[%s279 + $0x24] sm:$0x1] %vm280, %v323
        %357 = vst.msk [vmem:[%s279 + $0x28] sm:$0xe] %vm346, %v324
        %358 = vst.msk [vmem:[%s279 + $0x2c] sm:$0x1] %vm280, %v325
        %359 = vst.msk [vmem:[%s279 + $0x30] sm:$0xe] %vm346, %v326
        %360 = vst.msk [vmem:[%s279 + $0x34] sm:$0x1] %vm280, %v327
        %361 = vst.msk [vmem:[%s279 + $0x38] sm:$0xe] %vm346, %v328
        %362 = vst.msk [vmem:[%s279 + $0x3c] sm:$0x1] %vm280, %v329
        %s363 = scalar_lea.vmem [#allocation2], 8
        %v364 = vld [vmem:[%s363] sm:$0xf]
        %v365 = vld [vmem:[%s363 + $0x4] sm:$0x1]
        %v366 = vld [vmem:[%s363 + $0x8] sm:$0xf]
        %v367 = vld [vmem:[%s363 + $0xc] sm:$0x1]
        %v368 = vld [vmem:[%s363 + $0x10] sm:$0xf]
        %v369 = vld [vmem:[%s363 + $0x14] sm:$0x1]
        %v370 = vld [vmem:[%s363 + $0x18] sm:$0xf]
        %v371 = vld [vmem:[%s363 + $0x1c] sm:$0x1]
        %v372 = vld [vmem:[%s363 + $0x20] sm:$0xf]
        %v373 = vld [vmem:[%s363 + $0x24] sm:$0x1]
        %v374 = vld [vmem:[%s363 + $0x28] sm:$0xf]
        %v375 = vld [vmem:[%s363 + $0x2c] sm:$0x1]
        %v376 = vld [vmem:[%s363 + $0x30] sm:$0xf]
        %v377 = vld [vmem:[%s363 + $0x34] sm:$0x1]
        %v378 = vld [vmem:[%s363 + $0x38] sm:$0xf]
        %v379 = vld [vmem:[%s363 + $0x3c] sm:$0x1]
        %vm380 = vsmask.f32 3328
        %vm381 = vsmask.f32 7440
        %vm382 = vmor %vm380, %vm381
        %v384 = vshrl.u32 %v364, 16
        %v386 = vrot.slane %v384, 4
        %v387 = vshll.u32 %v364, 16
        %v389 = vrot.slane %v387, 5
        %v390 = vor.u32 %v386, %v389
        %v391 = vrot.slane %v390, 4
        %v393 = vshll.u32 %v365, 16
        %v395 = vrot.slane %v393, 5
        %v396 = vsel %vm382, %v391, %v395
        %v398 = vshrl.u32 %v366, 16
        %v400 = vrot.slane %v398, 4
        %v401 = vshll.u32 %v366, 16
        %v403 = vrot.slane %v401, 5
        %v404 = vor.u32 %v400, %v403
        %v405 = vrot.slane %v404, 4
        %v407 = vshll.u32 %v367, 16
        %v409 = vrot.slane %v407, 5
        %v410 = vsel %vm382, %v405, %v409
        %v412 = vshrl.u32 %v368, 16
        %v414 = vrot.slane %v412, 4
        %v415 = vshll.u32 %v368, 16
        %v417 = vrot.slane %v415, 5
        %v418 = vor.u32 %v414, %v417
        %v419 = vrot.slane %v418, 4
        %v421 = vshll.u32 %v369, 16
        %v423 = vrot.slane %v421, 5
        %v424 = vsel %vm382, %v419, %v423
        %v426 = vshrl.u32 %v370, 16
        %v428 = vrot.slane %v426, 4
        %v429 = vshll.u32 %v370, 16
        %v431 = vrot.slane %v429, 5
        %v432 = vor.u32 %v428, %v431
        %v433 = vrot.slane %v432, 4
        %v435 = vshll.u32 %v371, 16
        %v437 = vrot.slane %v435, 5
        %v438 = vsel %vm382, %v433, %v437
        %v440 = vshrl.u32 %v372, 16
        %v442 = vrot.slane %v440, 4
        %v443 = vshll.u32 %v372, 16
        %v445 = vrot.slane %v443, 5
        %v446 = vor.u32 %v442, %v445
        %v447 = vrot.slane %v446, 4
        %v449 = vshll.u32 %v373, 16
        %v451 = vrot.slane %v449, 5
        %v452 = vsel %vm382, %v447, %v451
        %v454 = vshrl.u32 %v374, 16
        %v456 = vrot.slane %v454, 4
        %v457 = vshll.u32 %v374, 16
        %v459 = vrot.slane %v457, 5
        %v460 = vor.u32 %v456, %v459
        %v461 = vrot.slane %v460, 4
        %v463 = vshll.u32 %v375, 16
        %v465 = vrot.slane %v463, 5
        %v466 = vsel %vm382, %v461, %v465
        %v468 = vshrl.u32 %v376, 16
        %v470 = vrot.slane %v468, 4
        %v471 = vshll.u32 %v376, 16
        %v473 = vrot.slane %v471, 5
        %v474 = vor.u32 %v470, %v473
        %v475 = vrot.slane %v474, 4
        %v477 = vshll.u32 %v377, 16
        %v479 = vrot.slane %v477, 5
        %v480 = vsel %vm382, %v475, %v479
        %v482 = vshrl.u32 %v378, 16
        %v484 = vrot.slane %v482, 4
        %v485 = vshll.u32 %v378, 16
        %v487 = vrot.slane %v485, 5
        %v488 = vor.u32 %v484, %v487
        %v489 = vrot.slane %v488, 4
        %v491 = vshll.u32 %v379, 16
        %v493 = vrot.slane %v491, 5
        %v494 = vsel %vm382, %v489, %v493
        %v495 = vld [vmem:[%s363] sm:$0xe]
        %v496 = vld [vmem:[%s363 + $0x8] sm:$0xe]
        %v497 = vld [vmem:[%s363 + $0x10] sm:$0xe]
        %v498 = vld [vmem:[%s363 + $0x18] sm:$0xe]
        %v499 = vld [vmem:[%s363 + $0x20] sm:$0xe]
        %v500 = vld [vmem:[%s363 + $0x28] sm:$0xe]
        %v501 = vld [vmem:[%s363 + $0x30] sm:$0xe]
        %v502 = vld [vmem:[%s363 + $0x38] sm:$0xe]
        %vm519 = vcmask 1042432
        %vm520 = vcmask 1046532
        %vm521 = vmor %vm519, %vm520
        %v522 = vrot.slane %v495, 5
        %v523 = vrot.slane %v522, 4
        %v524 = vrot.slane %v365, 5
        %v525 = vsel %vm521, %v523, %v524
        %v526 = vrot.slane %v496, 5
        %v527 = vrot.slane %v526, 4
        %v528 = vrot.slane %v367, 5
        %v529 = vsel %vm521, %v527, %v528
        %v530 = vrot.slane %v497, 5
        %v531 = vrot.slane %v530, 4
        %v532 = vrot.slane %v369, 5
        %v533 = vsel %vm521, %v531, %v532
        %v534 = vrot.slane %v498, 5
        %v535 = vrot.slane %v534, 4
        %v536 = vrot.slane %v371, 5
        %v537 = vsel %vm521, %v535, %v536
        %v538 = vrot.slane %v499, 5
        %v539 = vrot.slane %v538, 4
        %v540 = vrot.slane %v373, 5
        %v541 = vsel %vm521, %v539, %v540
        %v542 = vrot.slane %v500, 5
        %v543 = vrot.slane %v542, 4
        %v544 = vrot.slane %v375, 5
        %v545 = vsel %vm521, %v543, %v544
        %v546 = vrot.slane %v501, 5
        %v547 = vrot.slane %v546, 4
        %v548 = vrot.slane %v377, 5
        %v549 = vsel %vm521, %v547, %v548
        %v550 = vrot.slane %v502, 5
        %v551 = vrot.slane %v550, 4
        %v552 = vrot.slane %v379, 5
        %v553 = vsel %vm521, %v551, %v552
        %v554 = vld [vmem:[%s363 + $0x4] sm:$0x3]
        %v555 = vld [vmem:[%s363 + $0xc] sm:$0x3]
        %v556 = vld [vmem:[%s363 + $0x14] sm:$0x3]
        %v557 = vld [vmem:[%s363 + $0x1c] sm:$0x3]
        %v558 = vld [vmem:[%s363 + $0x24] sm:$0x3]
        %v559 = vld [vmem:[%s363 + $0x2c] sm:$0x3]
        %v560 = vld [vmem:[%s363 + $0x34] sm:$0x3]
        %v561 = vld [vmem:[%s363 + $0x3c] sm:$0x3]
        %vm562 = vsmask.f32 2304
        %vm563 = vsmask.f32 6416
        %vm564 = vmor %vm562, %vm563
        %v566 = vshrl.u32 %v495, 16
        %v568 = vrot.slane %v566, 5
        %v569 = vshll.u32 %v495, 16
        %v571 = vrot.slane %v569, 6
        %v572 = vor.u32 %v568, %v571
        %v573 = vrot.slane %v572, 4
        %v575 = vshrl.u32 %v554, 16
        %v577 = vrot.slane %v575, 5
        %v578 = vshll.u32 %v554, 16
        %v580 = vrot.slane %v578, 6
        %v581 = vor.u32 %v577, %v580
        %v582 = vsel %vm564, %v573, %v581
        %v584 = vshrl.u32 %v496, 16
        %v586 = vrot.slane %v584, 5
        %v587 = vshll.u32 %v496, 16
        %v589 = vrot.slane %v587, 6
        %v590 = vor.u32 %v586, %v589
        %v591 = vrot.slane %v590, 4
        %v593 = vshrl.u32 %v555, 16
        %v595 = vrot.slane %v593, 5
        %v596 = vshll.u32 %v555, 16
        %v598 = vrot.slane %v596, 6
        %v599 = vor.u32 %v595, %v598
        %v600 = vsel %vm564, %v591, %v599
        %v602 = vshrl.u32 %v497, 16
        %v604 = vrot.slane %v602, 5
        %v605 = vshll.u32 %v497, 16
        %v607 = vrot.slane %v605, 6
        %v608 = vor.u32 %v604, %v607
        %v609 = vrot.slane %v608, 4
        %v611 = vshrl.u32 %v556, 16
        %v613 = vrot.slane %v611, 5
        %v614 = vshll.u32 %v556, 16
        %v616 = vrot.slane %v614, 6
        %v617 = vor.u32 %v613, %v616
        %v618 = vsel %vm564, %v609, %v617
        %v620 = vshrl.u32 %v498, 16
        %v622 = vrot.slane %v620, 5
        %v623 = vshll.u32 %v498, 16
        %v625 = vrot.slane %v623, 6
        %v626 = vor.u32 %v622, %v625
        %v627 = vrot.slane %v626, 4
        %v629 = vshrl.u32 %v557, 16
        %v631 = vrot.slane %v629, 5
        %v632 = vshll.u32 %v557, 16
        %v634 = vrot.slane %v632, 6
        %v635 = vor.u32 %v631, %v634
        %v636 = vsel %vm564, %v627, %v635
        %v638 = vshrl.u32 %v499, 16
        %v640 = vrot.slane %v638, 5
        %v641 = vshll.u32 %v499, 16
        %v643 = vrot.slane %v641, 6
        %v644 = vor.u32 %v640, %v643
        %v645 = vrot.slane %v644, 4
        %v647 = vshrl.u32 %v558, 16
        %v649 = vrot.slane %v647, 5
        %v650 = vshll.u32 %v558, 16
        %v652 = vrot.slane %v650, 6
        %v653 = vor.u32 %v649, %v652
        %v654 = vsel %vm564, %v645, %v653
        %v656 = vshrl.u32 %v500, 16
        %v658 = vrot.slane %v656, 5
        %v659 = vshll.u32 %v500, 16
        %v661 = vrot.slane %v659, 6
        %v662 = vor.u32 %v658, %v661
        %v663 = vrot.slane %v662, 4
        %v665 = vshrl.u32 %v559, 16
        %v667 = vrot.slane %v665, 5
        %v668 = vshll.u32 %v559, 16
        %v670 = vrot.slane %v668, 6
        %v671 = vor.u32 %v667, %v670
        %v672 = vsel %vm564, %v663, %v671
        %v674 = vshrl.u32 %v501, 16
        %v676 = vrot.slane %v674, 5
        %v677 = vshll.u32 %v501, 16
        %v679 = vrot.slane %v677, 6
        %v680 = vor.u32 %v676, %v679
        %v681 = vrot.slane %v680, 4
        %v683 = vshrl.u32 %v560, 16
        %v685 = vrot.slane %v683, 5
        %v686 = vshll.u32 %v560, 16
        %v688 = vrot.slane %v686, 6
        %v689 = vor.u32 %v685, %v688
        %v690 = vsel %vm564, %v681, %v689
        %v692 = vshrl.u32 %v502, 16
        %v694 = vrot.slane %v692, 5
        %v695 = vshll.u32 %v502, 16
        %v697 = vrot.slane %v695, 6
        %v698 = vor.u32 %v694, %v697
        %v699 = vrot.slane %v698, 4
        %v701 = vshrl.u32 %v561, 16
        %v703 = vrot.slane %v701, 5
        %v704 = vshll.u32 %v561, 16
        %v706 = vrot.slane %v704, 6
        %v707 = vor.u32 %v703, %v706
        %v708 = vsel %vm564, %v699, %v707
        %v709 = vld [vmem:[%s279] sm:$0xf]
        %v710 = vld [vmem:[%s279 + $0x4] sm:$0x1]
        %v711 = vld [vmem:[%s279 + $0x8] sm:$0xf]
        %v712 = vld [vmem:[%s279 + $0xc] sm:$0x1]
        %v713 = vld [vmem:[%s279 + $0x10] sm:$0xf]
        %v714 = vld [vmem:[%s279 + $0x14] sm:$0x1]
        %v715 = vld [vmem:[%s279 + $0x18] sm:$0xf]
        %v716 = vld [vmem:[%s279 + $0x1c] sm:$0x1]
        %v717 = vld [vmem:[%s279 + $0x20] sm:$0xf]
        %v718 = vld [vmem:[%s279 + $0x24] sm:$0x1]
        %v719 = vld [vmem:[%s279 + $0x28] sm:$0xf]
        %v720 = vld [vmem:[%s279 + $0x2c] sm:$0x1]
        %v721 = vld [vmem:[%s279 + $0x30] sm:$0xf]
        %v722 = vld [vmem:[%s279 + $0x34] sm:$0x1]
        %v723 = vld [vmem:[%s279 + $0x38] sm:$0xf]
        %v724 = vld [vmem:[%s279 + $0x3c] sm:$0x1]
        %v726 = vshrl.u32 %v709, 16
        %v728 = vrot.slane %v726, 4
        %v729 = vshll.u32 %v709, 16
        %v731 = vrot.slane %v729, 5
        %v732 = vor.u32 %v728, %v731
        %v733 = vrot.slane %v732, 4
        %v735 = vshll.u32 %v710, 16
        %v737 = vrot.slane %v735, 5
        %v738 = vsel %vm382, %v733, %v737
        %v740 = vshrl.u32 %v711, 16
        %v742 = vrot.slane %v740, 4
        %v743 = vshll.u32 %v711, 16
        %v745 = vrot.slane %v743, 5
        %v746 = vor.u32 %v742, %v745
        %v747 = vrot.slane %v746, 4
        %v749 = vshll.u32 %v712, 16
        %v751 = vrot.slane %v749, 5
        %v752 = vsel %vm382, %v747, %v751
        %v754 = vshrl.u32 %v713, 16
        %v756 = vrot.slane %v754, 4
        %v757 = vshll.u32 %v713, 16
        %v759 = vrot.slane %v757, 5
        %v760 = vor.u32 %v756, %v759
        %v761 = vrot.slane %v760, 4
        %v763 = vshll.u32 %v714, 16
        %v765 = vrot.slane %v763, 5
        %v766 = vsel %vm382, %v761, %v765
        %v768 = vshrl.u32 %v715, 16
        %v770 = vrot.slane %v768, 4
        %v771 = vshll.u32 %v715, 16
        %v773 = vrot.slane %v771, 5
        %v774 = vor.u32 %v770, %v773
        %v775 = vrot.slane %v774, 4
        %v777 = vshll.u32 %v716, 16
        %v779 = vrot.slane %v777, 5
        %v780 = vsel %vm382, %v775, %v779
        %v782 = vshrl.u32 %v717, 16
        %v784 = vrot.slane %v782, 4
        %v785 = vshll.u32 %v717, 16
        %v787 = vrot.slane %v785, 5
        %v788 = vor.u32 %v784, %v787
        %v789 = vrot.slane %v788, 4
        %v791 = vshll.u32 %v718, 16
        %v793 = vrot.slane %v791, 5
        %v794 = vsel %vm382, %v789, %v793
        %v796 = vshrl.u32 %v719, 16
        %v798 = vrot.slane %v796, 4
        %v799 = vshll.u32 %v719, 16
        %v801 = vrot.slane %v799, 5
        %v802 = vor.u32 %v798, %v801
        %v803 = vrot.slane %v802, 4
        %v805 = vshll.u32 %v720, 16
        %v807 = vrot.slane %v805, 5
        %v808 = vsel %vm382, %v803, %v807
        %v810 = vshrl.u32 %v721, 16
        %v812 = vrot.slane %v810, 4
        %v813 = vshll.u32 %v721, 16
        %v815 = vrot.slane %v813, 5
        %v816 = vor.u32 %v812, %v815
        %v817 = vrot.slane %v816, 4
        %v819 = vshll.u32 %v722, 16
        %v821 = vrot.slane %v819, 5
        %v822 = vsel %vm382, %v817, %v821
        %v824 = vshrl.u32 %v723, 16
        %v826 = vrot.slane %v824, 4
        %v827 = vshll.u32 %v723, 16
        %v829 = vrot.slane %v827, 5
        %v830 = vor.u32 %v826, %v829
        %v831 = vrot.slane %v830, 4
        %v833 = vshll.u32 %v724, 16
        %v835 = vrot.slane %v833, 5
        %v836 = vsel %vm382, %v831, %v835
        %v837 = vld [vmem:[%s279] sm:$0xe]
        %v838 = vld [vmem:[%s279 + $0x8] sm:$0xe]
        %v839 = vld [vmem:[%s279 + $0x10] sm:$0xe]
        %v840 = vld [vmem:[%s279 + $0x18] sm:$0xe]
        %v841 = vld [vmem:[%s279 + $0x20] sm:$0xe]
        %v842 = vld [vmem:[%s279 + $0x28] sm:$0xe]
        %v843 = vld [vmem:[%s279 + $0x30] sm:$0xe]
        %v844 = vld [vmem:[%s279 + $0x38] sm:$0xe]
        %v861 = vrot.slane %v837, 5
        %v862 = vrot.slane %v861, 4
        %v863 = vrot.slane %v710, 5
        %v864 = vsel %vm521, %v862, %v863
        %v865 = vrot.slane %v838, 5
        %v866 = vrot.slane %v865, 4
        %v867 = vrot.slane %v712, 5
        %v868 = vsel %vm521, %v866, %v867
        %v869 = vrot.slane %v839, 5
        %v870 = vrot.slane %v869, 4
        %v871 = vrot.slane %v714, 5
        %v872 = vsel %vm521, %v870, %v871
        %v873 = vrot.slane %v840, 5
        %v874 = vrot.slane %v873, 4
        %v875 = vrot.slane %v716, 5
        %v876 = vsel %vm521, %v874, %v875
        %v877 = vrot.slane %v841, 5
        %v878 = vrot.slane %v877, 4
        %v879 = vrot.slane %v718, 5
        %v880 = vsel %vm521, %v878, %v879
        %v881 = vrot.slane %v842, 5
        %v882 = vrot.slane %v881, 4
        %v883 = vrot.slane %v720, 5
        %v884 = vsel %vm521, %v882, %v883
        %v885 = vrot.slane %v843, 5
        %v886 = vrot.slane %v885, 4
        %v887 = vrot.slane %v722, 5
        %v888 = vsel %vm521, %v886, %v887
        %v889 = vrot.slane %v844, 5
        %v890 = vrot.slane %v889, 4
        %v891 = vrot.slane %v724, 5
        %v892 = vsel %vm521, %v890, %v891
        %v893 = vld [vmem:[%s279 + $0x4] sm:$0x3]
        %v894 = vld [vmem:[%s279 + $0xc] sm:$0x3]
        %v895 = vld [vmem:[%s279 + $0x14] sm:$0x3]
        %v896 = vld [vmem:[%s279 + $0x1c] sm:$0x3]
        %v897 = vld [vmem:[%s279 + $0x24] sm:$0x3]
        %v898 = vld [vmem:[%s279 + $0x2c] sm:$0x3]
        %v899 = vld [vmem:[%s279 + $0x34] sm:$0x3]
        %v900 = vld [vmem:[%s279 + $0x3c] sm:$0x3]
        %v902 = vshrl.u32 %v837, 16
        %v904 = vrot.slane %v902, 5
        %v905 = vshll.u32 %v837, 16
        %v907 = vrot.slane %v905, 6
        %v908 = vor.u32 %v904, %v907
        %v909 = vrot.slane %v908, 4
        %v911 = vshrl.u32 %v893, 16
        %v913 = vrot.slane %v911, 5
        %v914 = vshll.u32 %v893, 16
        %v916 = vrot.slane %v914, 6
        %v917 = vor.u32 %v913, %v916
        %v918 = vsel %vm564, %v909, %v917
        %v920 = vshrl.u32 %v838, 16
        %v922 = vrot.slane %v920, 5
        %v923 = vshll.u32 %v838, 16
        %v925 = vrot.slane %v923, 6
        %v926 = vor.u32 %v922, %v925
        %v927 = vrot.slane %v926, 4
        %v929 = vshrl.u32 %v894, 16
        %v931 = vrot.slane %v929, 5
        %v932 = vshll.u32 %v894, 16
        %v934 = vrot.slane %v932, 6
        %v935 = vor.u32 %v931, %v934
        %v936 = vsel %vm564, %v927, %v935
        %v938 = vshrl.u32 %v839, 16
        %v940 = vrot.slane %v938, 5
        %v941 = vshll.u32 %v839, 16
        %v943 = vrot.slane %v941, 6
        %v944 = vor.u32 %v940, %v943
        %v945 = vrot.slane %v944, 4
        %v947 = vshrl.u32 %v895, 16
        %v949 = vrot.slane %v947, 5
        %v950 = vshll.u32 %v895, 16
        %v952 = vrot.slane %v950, 6
        %v953 = vor.u32 %v949, %v952
        %v954 = vsel %vm564, %v945, %v953
        %v956 = vshrl.u32 %v840, 16
        %v958 = vrot.slane %v956, 5
        %v959 = vshll.u32 %v840, 16
        %v961 = vrot.slane %v959, 6
        %v962 = vor.u32 %v958, %v961
        %v963 = vrot.slane %v962, 4
        %v965 = vshrl.u32 %v896, 16
        %v967 = vrot.slane %v965, 5
        %v968 = vshll.u32 %v896, 16
        %v970 = vrot.slane %v968, 6
        %v971 = vor.u32 %v967, %v970
        %v972 = vsel %vm564, %v963, %v971
        %v974 = vshrl.u32 %v841, 16
        %v976 = vrot.slane %v974, 5
        %v977 = vshll.u32 %v841, 16
        %v979 = vrot.slane %v977, 6
        %v980 = vor.u32 %v976, %v979
        %v981 = vrot.slane %v980, 4
        %v983 = vshrl.u32 %v897, 16
        %v985 = vrot.slane %v983, 5
        %v986 = vshll.u32 %v897, 16
        %v988 = vrot.slane %v986, 6
        %v989 = vor.u32 %v985, %v988
        %v990 = vsel %vm564, %v981, %v989
        %v992 = vshrl.u32 %v842, 16
        %v994 = vrot.slane %v992, 5
        %v995 = vshll.u32 %v842, 16
        %v997 = vrot.slane %v995, 6
        %v998 = vor.u32 %v994, %v997
        %v999 = vrot.slane %v998, 4
        %v1001 = vshrl.u32 %v898, 16
        %v1003 = vrot.slane %v1001, 5
        %v1004 = vshll.u32 %v898, 16
        %v1006 = vrot.slane %v1004, 6
        %v1007 = vor.u32 %v1003, %v1006
        %v1008 = vsel %vm564, %v999, %v1007
        %v1010 = vshrl.u32 %v843, 16
        %v1012 = vrot.slane %v1010, 5
        %v1013 = vshll.u32 %v843, 16
        %v1015 = vrot.slane %v1013, 6
        %v1016 = vor.u32 %v1012, %v1015
        %v1017 = vrot.slane %v1016, 4
        %v1019 = vshrl.u32 %v899, 16
        %v1021 = vrot.slane %v1019, 5
        %v1022 = vshll.u32 %v899, 16
        %v1024 = vrot.slane %v1022, 6
        %v1025 = vor.u32 %v1021, %v1024
        %v1026 = vsel %vm564, %v1017, %v1025
        %v1028 = vshrl.u32 %v844, 16
        %v1030 = vrot.slane %v1028, 5
        %v1031 = vshll.u32 %v844, 16
        %v1033 = vrot.slane %v1031, 6
        %v1034 = vor.u32 %v1030, %v1033
        %v1035 = vrot.slane %v1034, 4
        %v1037 = vshrl.u32 %v900, 16
        %v1039 = vrot.slane %v1037, 5
        %v1040 = vshll.u32 %v900, 16
        %v1042 = vrot.slane %v1040, 6
        %v1043 = vor.u32 %v1039, %v1042
        %v1044 = vsel %vm564, %v1035, %v1043
        %s1045 = scalar_lea.vmem [#allocation2], 24
        %v1046 = vld [vmem:[%s1045] sm:$0xf]
        %v1047 = vld [vmem:[%s1045 + $0x4] sm:$0x1]
        %v1048 = vld [vmem:[%s1045 + $0x8] sm:$0xf]
        %v1049 = vld [vmem:[%s1045 + $0xc] sm:$0x1]
        %v1050 = vld [vmem:[%s1045 + $0x10] sm:$0xf]
        %v1051 = vld [vmem:[%s1045 + $0x14] sm:$0x1]
        %v1052 = vld [vmem:[%s1045 + $0x18] sm:$0xf]
        %v1053 = vld [vmem:[%s1045 + $0x1c] sm:$0x1]
        %v1054 = vld [vmem:[%s1045 + $0x20] sm:$0xf]
        %v1055 = vld [vmem:[%s1045 + $0x24] sm:$0x1]
        %v1056 = vld [vmem:[%s1045 + $0x28] sm:$0xf]
        %v1057 = vld [vmem:[%s1045 + $0x2c] sm:$0x1]
        %v1058 = vld [vmem:[%s1045 + $0x30] sm:$0xf]
        %v1059 = vld [vmem:[%s1045 + $0x34] sm:$0x1]
        %v1060 = vld [vmem:[%s1045 + $0x38] sm:$0xf]
        %v1061 = vld [vmem:[%s1045 + $0x3c] sm:$0x1]
        %v1063 = vshrl.u32 %v1046, 16
        %v1065 = vrot.slane %v1063, 4
        %v1066 = vshll.u32 %v1046, 16
        %v1068 = vrot.slane %v1066, 5
        %v1069 = vor.u32 %v1065, %v1068
        %v1070 = vrot.slane %v1069, 4
        %v1072 = vshll.u32 %v1047, 16
        %v1074 = vrot.slane %v1072, 5
        %v1075 = vsel %vm382, %v1070, %v1074
        %v1077 = vshrl.u32 %v1048, 16
        %v1079 = vrot.slane %v1077, 4
        %v1080 = vshll.u32 %v1048, 16
        %v1082 = vrot.slane %v1080, 5
        %v1083 = vor.u32 %v1079, %v1082
        %v1084 = vrot.slane %v1083, 4
        %v1086 = vshll.u32 %v1049, 16
        %v1088 = vrot.slane %v1086, 5
        %v1089 = vsel %vm382, %v1084, %v1088
        %v1091 = vshrl.u32 %v1050, 16
        %v1093 = vrot.slane %v1091, 4
        %v1094 = vshll.u32 %v1050, 16
        %v1096 = vrot.slane %v1094, 5
        %v1097 = vor.u32 %v1093, %v1096
        %v1098 = vrot.slane %v1097, 4
        %v1100 = vshll.u32 %v1051, 16
        %v1102 = vrot.slane %v1100, 5
        %v1103 = vsel %vm382, %v1098, %v1102
        %v1105 = vshrl.u32 %v1052, 16
        %v1107 = vrot.slane %v1105, 4
        %v1108 = vshll.u32 %v1052, 16
        %v1110 = vrot.slane %v1108, 5
        %v1111 = vor.u32 %v1107, %v1110
        %v1112 = vrot.slane %v1111, 4
        %v1114 = vshll.u32 %v1053, 16
        %v1116 = vrot.slane %v1114, 5
        %v1117 = vsel %vm382, %v1112, %v1116
        %v1119 = vshrl.u32 %v1054, 16
        %v1121 = vrot.slane %v1119, 4
        %v1122 = vshll.u32 %v1054, 16
        %v1124 = vrot.slane %v1122, 5
        %v1125 = vor.u32 %v1121, %v1124
        %v1126 = vrot.slane %v1125, 4
        %v1128 = vshll.u32 %v1055, 16
        %v1130 = vrot.slane %v1128, 5
        %v1131 = vsel %vm382, %v1126, %v1130
        %v1133 = vshrl.u32 %v1056, 16
        %v1135 = vrot.slane %v1133, 4
        %v1136 = vshll.u32 %v1056, 16
        %v1138 = vrot.slane %v1136, 5
        %v1139 = vor.u32 %v1135, %v1138
        %v1140 = vrot.slane %v1139, 4
        %v1142 = vshll.u32 %v1057, 16
        %v1144 = vrot.slane %v1142, 5
        %v1145 = vsel %vm382, %v1140, %v1144
        %v1147 = vshrl.u32 %v1058, 16
        %v1149 = vrot.slane %v1147, 4
        %v1150 = vshll.u32 %v1058, 16
        %v1152 = vrot.slane %v1150, 5
        %v1153 = vor.u32 %v1149, %v1152
        %v1154 = vrot.slane %v1153, 4
        %v1156 = vshll.u32 %v1059, 16
        %v1158 = vrot.slane %v1156, 5
        %v1159 = vsel %vm382, %v1154, %v1158
        %v1161 = vshrl.u32 %v1060, 16
        %v1163 = vrot.slane %v1161, 4
        %v1164 = vshll.u32 %v1060, 16
        %v1166 = vrot.slane %v1164, 5
        %v1167 = vor.u32 %v1163, %v1166
        %v1168 = vrot.slane %v1167, 4
        %v1170 = vshll.u32 %v1061, 16
        %v1172 = vrot.slane %v1170, 5
        %v1173 = vsel %vm382, %v1168, %v1172
        %v1174 = vld [vmem:[%s1045] sm:$0xe]
        %v1175 = vld [vmem:[%s1045 + $0x8] sm:$0xe]
        %v1176 = vld [vmem:[%s1045 + $0x10] sm:$0xe]
        %v1177 = vld [vmem:[%s1045 + $0x18] sm:$0xe]
        %v1178 = vld [vmem:[%s1045 + $0x20] sm:$0xe]
        %v1179 = vld [vmem:[%s1045 + $0x28] sm:$0xe]
        %v1180 = vld [vmem:[%s1045 + $0x30] sm:$0xe]
        %v1181 = vld [vmem:[%s1045 + $0x38] sm:$0xe]
        %v1198 = vrot.slane %v1174, 5
        %v1199 = vrot.slane %v1198, 4
        %v1200 = vrot.slane %v1047, 5
        %v1201 = vsel %vm521, %v1199, %v1200
        %v1202 = vrot.slane %v1175, 5
        %v1203 = vrot.slane %v1202, 4
        %v1204 = vrot.slane %v1049, 5
        %v1205 = vsel %vm521, %v1203, %v1204
        %v1206 = vrot.slane %v1176, 5
        %v1207 = vrot.slane %v1206, 4
        %v1208 = vrot.slane %v1051, 5
        %v1209 = vsel %vm521, %v1207, %v1208
        %v1210 = vrot.slane %v1177, 5
        %v1211 = vrot.slane %v1210, 4
        %v1212 = vrot.slane %v1053, 5
        %v1213 = vsel %vm521, %v1211, %v1212
        %v1214 = vrot.slane %v1178, 5
        %v1215 = vrot.slane %v1214, 4
        %v1216 = vrot.slane %v1055, 5
        %v1217 = vsel %vm521, %v1215, %v1216
        %v1218 = vrot.slane %v1179, 5
        %v1219 = vrot.slane %v1218, 4
        %v1220 = vrot.slane %v1057, 5
        %v1221 = vsel %vm521, %v1219, %v1220
        %v1222 = vrot.slane %v1180, 5
        %v1223 = vrot.slane %v1222, 4
        %v1224 = vrot.slane %v1059, 5
        %v1225 = vsel %vm521, %v1223, %v1224
        %v1226 = vrot.slane %v1181, 5
        %v1227 = vrot.slane %v1226, 4
        %v1228 = vrot.slane %v1061, 5
        %v1229 = vsel %vm521, %v1227, %v1228
        %v1230 = vld [vmem:[%s1045 + $0x4] sm:$0x3]
        %v1231 = vld [vmem:[%s1045 + $0xc] sm:$0x3]
        %v1232 = vld [vmem:[%s1045 + $0x14] sm:$0x3]
        %v1233 = vld [vmem:[%s1045 + $0x1c] sm:$0x3]
        %v1234 = vld [vmem:[%s1045 + $0x24] sm:$0x3]
        %v1235 = vld [vmem:[%s1045 + $0x2c] sm:$0x3]
        %v1236 = vld [vmem:[%s1045 + $0x34] sm:$0x3]
        %v1237 = vld [vmem:[%s1045 + $0x3c] sm:$0x3]
        %v1239 = vshrl.u32 %v1174, 16
        %v1241 = vrot.slane %v1239, 5
        %v1242 = vshll.u32 %v1174, 16
        %v1244 = vrot.slane %v1242, 6
        %v1245 = vor.u32 %v1241, %v1244
        %v1246 = vrot.slane %v1245, 4
        %v1248 = vshrl.u32 %v1230, 16
        %v1250 = vrot.slane %v1248, 5
        %v1251 = vshll.u32 %v1230, 16
        %v1253 = vrot.slane %v1251, 6
        %v1254 = vor.u32 %v1250, %v1253
        %v1255 = vsel %vm564, %v1246, %v1254
        %v1257 = vshrl.u32 %v1175, 16
        %v1259 = vrot.slane %v1257, 5
        %v1260 = vshll.u32 %v1175, 16
        %v1262 = vrot.slane %v1260, 6
        %v1263 = vor.u32 %v1259, %v1262
        %v1264 = vrot.slane %v1263, 4
        %v1266 = vshrl.u32 %v1231, 16
        %v1268 = vrot.slane %v1266, 5
        %v1269 = vshll.u32 %v1231, 16
        %v1271 = vrot.slane %v1269, 6
        %v1272 = vor.u32 %v1268, %v1271
        %v1273 = vsel %vm564, %v1264, %v1272
        %v1275 = vshrl.u32 %v1176, 16
        %v1277 = vrot.slane %v1275, 5
        %v1278 = vshll.u32 %v1176, 16
        %v1280 = vrot.slane %v1278, 6
        %v1281 = vor.u32 %v1277, %v1280
        %v1282 = vrot.slane %v1281, 4
        %v1284 = vshrl.u32 %v1232, 16
        %v1286 = vrot.slane %v1284, 5
        %v1287 = vshll.u32 %v1232, 16
        %v1289 = vrot.slane %v1287, 6
        %v1290 = vor.u32 %v1286, %v1289
        %v1291 = vsel %vm564, %v1282, %v1290
        %v1293 = vshrl.u32 %v1177, 16
        %v1295 = vrot.slane %v1293, 5
        %v1296 = vshll.u32 %v1177, 16
        %v1298 = vrot.slane %v1296, 6
        %v1299 = vor.u32 %v1295, %v1298
        %v1300 = vrot.slane %v1299, 4
        %v1302 = vshrl.u32 %v1233, 16
        %v1304 = vrot.slane %v1302, 5
        %v1305 = vshll.u32 %v1233, 16
        %v1307 = vrot.slane %v1305, 6
        %v1308 = vor.u32 %v1304, %v1307
        %v1309 = vsel %vm564, %v1300, %v1308
        %v1311 = vshrl.u32 %v1178, 16
        %v1313 = vrot.slane %v1311, 5
        %v1314 = vshll.u32 %v1178, 16
        %v1316 = vrot.slane %v1314, 6
        %v1317 = vor.u32 %v1313, %v1316
        %v1318 = vrot.slane %v1317, 4
        %v1320 = vshrl.u32 %v1234, 16
        %v1322 = vrot.slane %v1320, 5
        %v1323 = vshll.u32 %v1234, 16
        %v1325 = vrot.slane %v1323, 6
        %v1326 = vor.u32 %v1322, %v1325
        %v1327 = vsel %vm564, %v1318, %v1326
        %v1329 = vshrl.u32 %v1179, 16
        %v1331 = vrot.slane %v1329, 5
        %v1332 = vshll.u32 %v1179, 16
        %v1334 = vrot.slane %v1332, 6
        %v1335 = vor.u32 %v1331, %v1334
        %v1336 = vrot.slane %v1335, 4
        %v1338 = vshrl.u32 %v1235, 16
        %v1340 = vrot.slane %v1338, 5
        %v1341 = vshll.u32 %v1235, 16
        %v1343 = vrot.slane %v1341, 6
        %v1344 = vor.u32 %v1340, %v1343
        %v1345 = vsel %vm564, %v1336, %v1344
        %v1347 = vshrl.u32 %v1180, 16
        %v1349 = vrot.slane %v1347, 5
        %v1350 = vshll.u32 %v1180, 16
        %v1352 = vrot.slane %v1350, 6
        %v1353 = vor.u32 %v1349, %v1352
        %v1354 = vrot.slane %v1353, 4
        %v1356 = vshrl.u32 %v1236, 16
        %v1358 = vrot.slane %v1356, 5
        %v1359 = vshll.u32 %v1236, 16
        %v1361 = vrot.slane %v1359, 6
        %v1362 = vor.u32 %v1358, %v1361
        %v1363 = vsel %vm564, %v1354, %v1362
        %v1365 = vshrl.u32 %v1181, 16
        %v1367 = vrot.slane %v1365, 5
        %v1368 = vshll.u32 %v1181, 16
        %v1370 = vrot.slane %v1368, 6
        %v1371 = vor.u32 %v1367, %v1370
        %v1372 = vrot.slane %v1371, 4
        %v1374 = vshrl.u32 %v1237, 16
        %v1376 = vrot.slane %v1374, 5
        %v1377 = vshll.u32 %v1237, 16
        %v1379 = vrot.slane %v1377, 6
        %v1380 = vor.u32 %v1376, %v1379
        %v1381 = vsel %vm564, %v1372, %v1380
        %v1382 = vunpack.c.l.b16 %v396
        %v1383 = vunpack.c.l.b16 %v410
        %v1384 = vunpack.c.l.b16 %v424
        %v1385 = vunpack.c.l.b16 %v438
        %v1386 = vunpack.c.l.b16 %v452
        %v1387 = vunpack.c.l.b16 %v466
        %v1388 = vunpack.c.l.b16 %v480
        %v1389 = vunpack.c.l.b16 %v494
        %v1390 = vpack.c.b16 %v1383, %v1382
        %v1391 = vpack.c.b16 %v1385, %v1384
        %v1392 = vpack.c.b16 %v1387, %v1386
        %v1393 = vpack.c.b16 %v1389, %v1388
        %v1394 = vunpack.c.l.b16 %v525
        %v1395 = vunpack.c.l.b16 %v529
        %v1396 = vunpack.c.l.b16 %v533
        %v1397 = vunpack.c.l.b16 %v537
        %v1398 = vunpack.c.l.b16 %v541
        %v1399 = vunpack.c.l.b16 %v545
        %v1400 = vunpack.c.l.b16 %v549
        %v1401 = vunpack.c.l.b16 %v553
        %v1402 = vpack.c.b16 %v1395, %v1394
        %v1403 = vpack.c.b16 %v1397, %v1396
        %v1404 = vpack.c.b16 %v1399, %v1398
        %v1405 = vpack.c.b16 %v1401, %v1400
        %1406 = vrot.lane.b32.xlu0 %v1402, 32
        %v1407 = vpop.permute.xlu0 %1406
        %1408 = vrot.lane.b32.xlu0 %v1403, 32
        %v1409 = vpop.permute.xlu0 %1408
        %1410 = vrot.lane.b32.xlu0 %v1404, 32
        %v1411 = vpop.permute.xlu0 %1410
        %1412 = vrot.lane.b32.xlu0 %v1405, 32
        %v1413 = vpop.permute.xlu0 %1412
        %v1414 = vunpack.c.l.b16 %v582
        %v1415 = vunpack.c.l.b16 %v600
        %v1416 = vunpack.c.l.b16 %v618
        %v1417 = vunpack.c.l.b16 %v636
        %v1418 = vunpack.c.l.b16 %v654
        %v1419 = vunpack.c.l.b16 %v672
        %v1420 = vunpack.c.l.b16 %v690
        %v1421 = vunpack.c.l.b16 %v708
        %v1422 = vpack.c.b16 %v1415, %v1414
        %v1423 = vpack.c.b16 %v1417, %v1416
        %v1424 = vpack.c.b16 %v1419, %v1418
        %v1425 = vpack.c.b16 %v1421, %v1420
        %1426 = vrot.lane.b32.xlu0 %v1422, 64
        %v1427 = vpop.permute.xlu0 %1426
        %1428 = vrot.lane.b32.xlu0 %v1423, 64
        %v1429 = vpop.permute.xlu0 %1428
        %1430 = vrot.lane.b32.xlu0 %v1424, 64
        %v1431 = vpop.permute.xlu0 %1430
        %1432 = vrot.lane.b32.xlu0 %v1425, 64
        %v1433 = vpop.permute.xlu0 %1432
        %v1434 = vunpack.c.l.b16 %v738
        %v1435 = vunpack.c.l.b16 %v752
        %v1436 = vunpack.c.l.b16 %v766
        %v1437 = vunpack.c.l.b16 %v780
        %v1438 = vunpack.c.l.b16 %v794
        %v1439 = vunpack.c.l.b16 %v808
        %v1440 = vunpack.c.l.b16 %v822
        %v1441 = vunpack.c.l.b16 %v836
        %v1442 = vpack.c.b16 %v1435, %v1434
        %v1443 = vpack.c.b16 %v1437, %v1436
        %v1444 = vpack.c.b16 %v1439, %v1438
        %v1445 = vpack.c.b16 %v1441, %v1440
        %1446 = vrot.lane.b32.xlu0 %v1442, 96
        %v1447 = vpop.permute.xlu0 %1446
        %1448 = vrot.lane.b32.xlu0 %v1443, 96
        %v1449 = vpop.permute.xlu0 %1448
        %1450 = vrot.lane.b32.xlu0 %v1444, 96
        %v1451 = vpop.permute.xlu0 %1450
        %1452 = vrot.lane.b32.xlu0 %v1445, 96
        %v1453 = vpop.permute.xlu0 %1452
        %v1454 = vunpack.c.l.b16 %v864
        %v1455 = vunpack.c.l.b16 %v868
        %v1456 = vunpack.c.l.b16 %v872
        %v1457 = vunpack.c.l.b16 %v876
        %v1458 = vunpack.c.l.b16 %v880
        %v1459 = vunpack.c.l.b16 %v884
        %v1460 = vunpack.c.l.b16 %v888
        %v1461 = vunpack.c.l.b16 %v892
        %v1462 = vpack.c.b16 %v1455, %v1454
        %v1463 = vpack.c.b16 %v1457, %v1456
        %v1464 = vpack.c.b16 %v1459, %v1458
        %v1465 = vpack.c.b16 %v1461, %v1460
        %v1466 = vunpack.c.l.b16 %v918
        %v1467 = vunpack.c.l.b16 %v936
        %v1468 = vunpack.c.l.b16 %v954
        %v1469 = vunpack.c.l.b16 %v972
        %v1470 = vunpack.c.l.b16 %v990
        %v1471 = vunpack.c.l.b16 %v1008
        %v1472 = vunpack.c.l.b16 %v1026
        %v1473 = vunpack.c.l.b16 %v1044
        %v1474 = vpack.c.b16 %v1467, %v1466
        %v1475 = vpack.c.b16 %v1469, %v1468
        %v1476 = vpack.c.b16 %v1471, %v1470
        %v1477 = vpack.c.b16 %v1473, %v1472
        %1478 = vrot.lane.b32.xlu0 %v1474, 32
        %v1479 = vpop.permute.xlu0 %1478
        %1480 = vrot.lane.b32.xlu0 %v1475, 32
        %v1481 = vpop.permute.xlu0 %1480
        %1482 = vrot.lane.b32.xlu0 %v1476, 32
        %v1483 = vpop.permute.xlu0 %1482
        %1484 = vrot.lane.b32.xlu0 %v1477, 32
        %v1485 = vpop.permute.xlu0 %1484
        %v1486 = vunpack.c.l.b16 %v1075
        %v1487 = vunpack.c.l.b16 %v1089
        %v1488 = vunpack.c.l.b16 %v1103
        %v1489 = vunpack.c.l.b16 %v1117
        %v1490 = vunpack.c.l.b16 %v1131
        %v1491 = vunpack.c.l.b16 %v1145
        %v1492 = vunpack.c.l.b16 %v1159
        %v1493 = vunpack.c.l.b16 %v1173
        %v1494 = vpack.c.b16 %v1487, %v1486
        %v1495 = vpack.c.b16 %v1489, %v1488
        %v1496 = vpack.c.b16 %v1491, %v1490
        %v1497 = vpack.c.b16 %v1493, %v1492
        %1498 = vrot.lane.b32.xlu0 %v1494, 64
        %v1499 = vpop.permute.xlu0 %1498
        %1500 = vrot.lane.b32.xlu0 %v1495, 64
        %v1501 = vpop.permute.xlu0 %1500
        %1502 = vrot.lane.b32.xlu0 %v1496, 64
        %v1503 = vpop.permute.xlu0 %1502
        %1504 = vrot.lane.b32.xlu0 %v1497, 64
        %v1505 = vpop.permute.xlu0 %1504
        %v1506 = vunpack.c.l.b16 %v1201
        %v1507 = vunpack.c.l.b16 %v1205
        %v1508 = vunpack.c.l.b16 %v1209
        %v1509 = vunpack.c.l.b16 %v1213
        %v1510 = vunpack.c.l.b16 %v1217
        %v1511 = vunpack.c.l.b16 %v1221
        %v1512 = vunpack.c.l.b16 %v1225
        %v1513 = vunpack.c.l.b16 %v1229
        %v1514 = vpack.c.b16 %v1507, %v1506
        %v1515 = vpack.c.b16 %v1509, %v1508
        %v1516 = vpack.c.b16 %v1511, %v1510
        %v1517 = vpack.c.b16 %v1513, %v1512
        %1518 = vrot.lane.b32.xlu0 %v1514, 96
        %v1519 = vpop.permute.xlu0 %1518
        %1520 = vrot.lane.b32.xlu0 %v1515, 96
        %v1521 = vpop.permute.xlu0 %1520
        %1522 = vrot.lane.b32.xlu0 %v1516, 96
        %v1523 = vpop.permute.xlu0 %1522
        %1524 = vrot.lane.b32.xlu0 %v1517, 96
        %v1525 = vpop.permute.xlu0 %1524
        %v1526 = vunpack.c.l.b16 %v1255
        %v1527 = vunpack.c.l.b16 %v1273
        %v1528 = vunpack.c.l.b16 %v1291
        %v1529 = vunpack.c.l.b16 %v1309
        %v1530 = vunpack.c.l.b16 %v1327
        %v1531 = vunpack.c.l.b16 %v1345
        %v1532 = vunpack.c.l.b16 %v1363
        %v1533 = vunpack.c.l.b16 %v1381
        %v1534 = vpack.c.b16 %v1527, %v1526
        %v1535 = vpack.c.b16 %v1529, %v1528
        %v1536 = vpack.c.b16 %v1531, %v1530
        %v1537 = vpack.c.b16 %v1533, %v1532
        %vm1538 = vcmask 261120
        %v1541 = vsel %vm1538, %v1390, %v1407
        %v1544 = vsel %vm1538, %v1391, %v1409
        %v1547 = vsel %vm1538, %v1392, %v1411
        %v1550 = vsel %vm1538, %v1393, %v1413
        %vm1551 = vcmask 523264
        %v1553 = vsel %vm1551, %v1541, %v1427
        %v1555 = vsel %vm1551, %v1544, %v1429
        %v1557 = vsel %vm1551, %v1547, %v1431
        %v1559 = vsel %vm1551, %v1550, %v1433
        %vm1560 = vcmask 785408
        %v1562 = vsel %vm1560, %v1553, %v1447
        %v1565 = vsel %vm1560, %v1555, %v1449
        %v1568 = vsel %vm1560, %v1557, %v1451
        %v1571 = vsel %vm1560, %v1559, %v1453
        %v1575 = vsel %vm1538, %v1462, %v1479
        %v1578 = vsel %vm1538, %v1463, %v1481
        %v1581 = vsel %vm1538, %v1464, %v1483
        %v1584 = vsel %vm1538, %v1465, %v1485
        %v1586 = vsel %vm1551, %v1575, %v1499
        %v1588 = vsel %vm1551, %v1578, %v1501
        %v1590 = vsel %vm1551, %v1581, %v1503
        %v1592 = vsel %vm1551, %v1584, %v1505
        %v1594 = vsel %vm1560, %v1586, %v1519
        %v1597 = vsel %vm1560, %v1588, %v1521
        %v1600 = vsel %vm1560, %v1590, %v1523
        %v1603 = vsel %vm1560, %v1592, %v1525
        %v1605 = vld [vmem:[#allocation4] sm:$0xf]
        %v1606 = vld [vmem:[#allocation4 + $0x4] sm:$0xf]
        %v1607 = vld [vmem:[#allocation4 + $0x8] sm:$0xf]
        %v1608 = vld [vmem:[#allocation4 + $0xc] sm:$0xf]
        %v1609 = vld [vmem:[#allocation4 + $0x10] sm:$0xf]
        %v1610 = vld [vmem:[#allocation4 + $0x14] sm:$0xf]
        %v1611 = vld [vmem:[#allocation4 + $0x18] sm:$0xf]
        %v1612 = vld [vmem:[#allocation4 + $0x1c] sm:$0xf]
        %v1613 = vld [vmem:[#allocation4 + $0x20] sm:$0xf]
        %v1614 = vld [vmem:[#allocation4 + $0x24] sm:$0xf]
        %v1615 = vld [vmem:[#allocation4 + $0x28] sm:$0xf]
        %v1616 = vld [vmem:[#allocation4 + $0x2c] sm:$0xf]
        %v1617 = vld [vmem:[#allocation4 + $0x30] sm:$0xf]
        %v1618 = vld [vmem:[#allocation4 + $0x34] sm:$0xf]
        %v1619 = vld [vmem:[#allocation4 + $0x38] sm:$0xf]
        %v1620 = vld [vmem:[#allocation4 + $0x3c] sm:$0xf]
        %v1621 = vld [vmem:[#allocation4 + $0x40] sm:$0xf]
        %v1622 = vld [vmem:[#allocation4 + $0x44] sm:$0xf]
        %v1623 = vld [vmem:[#allocation4 + $0x48] sm:$0xf]
        %v1624 = vld [vmem:[#allocation4 + $0x4c] sm:$0xf]
        %v1625 = vld [vmem:[#allocation4 + $0x50] sm:$0xf]
        %v1626 = vld [vmem:[#allocation4 + $0x54] sm:$0xf]
        %v1627 = vld [vmem:[#allocation4 + $0x58] sm:$0xf]
        %v1628 = vld [vmem:[#allocation4 + $0x5c] sm:$0xf]
        %v1629 = vld [vmem:[#allocation4 + $0x60] sm:$0xf]
        %v1630 = vld [vmem:[#allocation4 + $0x64] sm:$0xf]
        %v1631 = vld [vmem:[#allocation4 + $0x68] sm:$0xf]
        %v1632 = vld [vmem:[#allocation4 + $0x6c] sm:$0xf]
        %v1633 = vld [vmem:[#allocation4 + $0x70] sm:$0xf]
        %v1634 = vld [vmem:[#allocation4 + $0x74] sm:$0xf]
        %v1635 = vld [vmem:[#allocation4 + $0x78] sm:$0xf]
        %v1636 = vld [vmem:[#allocation4 + $0x7c] sm:$0xf]
        %v1637 = vld [vmem:[#allocation4 + $0x80] sm:$0xf]
        %v1638 = vld [vmem:[#allocation4 + $0x84] sm:$0xf]
        %v1639 = vld [vmem:[#allocation4 + $0x88] sm:$0xf]
        %v1640 = vld [vmem:[#allocation4 + $0x8c] sm:$0xf]
        %v1641 = vld [vmem:[%s2] sm:$0x1]
        %v1642 = vperm.slane %v1641, 0
        %v1679 = vunpack.c.l.b16 %v1605
        %v1680 = vunpack.c.l.b16 %v1606
        %v1681 = vunpack.c.l.b16 %v1607
        %v1682 = vunpack.c.l.b16 %v1608
        %v1683 = vunpack.c.l.b16 %v1609
        %v1684 = vunpack.c.l.b16 %v1610
        %v1685 = vunpack.c.l.b16 %v1611
        %v1686 = vunpack.c.l.b16 %v1612
        %v1687 = vunpack.c.l.b16 %v1613
        %v1688 = vunpack.c.l.b16 %v1614
        %v1689 = vunpack.c.l.b16 %v1615
        %v1690 = vunpack.c.l.b16 %v1616
        %v1691 = vunpack.c.l.b16 %v1617
        %v1692 = vunpack.c.l.b16 %v1618
        %v1693 = vunpack.c.l.b16 %v1619
        %v1694 = vunpack.c.l.b16 %v1620
        %v1695 = vunpack.c.l.b16 %v1621
        %v1696 = vunpack.c.l.b16 %v1622
        %v1697 = vunpack.c.l.b16 %v1623
        %v1698 = vunpack.c.l.b16 %v1624
        %v1699 = vunpack.c.l.b16 %v1625
        %v1700 = vunpack.c.l.b16 %v1626
        %v1701 = vunpack.c.l.b16 %v1627
        %v1702 = vunpack.c.l.b16 %v1628
        %v1703 = vunpack.c.l.b16 %v1629
        %v1704 = vunpack.c.l.b16 %v1630
        %v1705 = vunpack.c.l.b16 %v1631
        %v1706 = vunpack.c.l.b16 %v1632
        %v1707 = vunpack.c.l.b16 %v1633
        %v1708 = vunpack.c.l.b16 %v1634
        %v1709 = vunpack.c.l.b16 %v1635
        %v1710 = vunpack.c.l.b16 %v1636
        %v1711 = vunpack.c.l.b16 %v1637
        %v1712 = vunpack.c.l.b16 %v1638
        %v1713 = vunpack.c.l.b16 %v1639
        %v1714 = vunpack.c.l.b16 %v1640
        %v1715 = vpack.c.b16 %v1680, %v1679
        %v1716 = vpack.c.b16 %v1682, %v1681
        %v1717 = vpack.c.b16 %v1684, %v1683
        %v1718 = vpack.c.b16 %v1686, %v1685
        %v1719 = vpack.c.b16 %v1688, %v1687
        %v1720 = vpack.c.b16 %v1690, %v1689
        %v1721 = vpack.c.b16 %v1692, %v1691
        %v1722 = vpack.c.b16 %v1694, %v1693
        %v1723 = vpack.c.b16 %v1696, %v1695
        %v1724 = vpack.c.b16 %v1698, %v1697
        %v1725 = vpack.c.b16 %v1700, %v1699
        %v1726 = vpack.c.b16 %v1702, %v1701
        %v1727 = vpack.c.b16 %v1704, %v1703
        %v1728 = vpack.c.b16 %v1706, %v1705
        %v1729 = vpack.c.b16 %v1708, %v1707
        %v1730 = vpack.c.b16 %v1710, %v1709
        %v1731 = vpack.c.b16 %v1712, %v1711
        %v1732 = vpack.c.b16 %v1714, %v1713
        %v1752 = vsel %vm1538, %v1534, 0
        %v1755 = vsel %vm1538, %v1535, 0
        %v1758 = vsel %vm1538, %v1536, 0
        %v1761 = vsel %vm1538, %v1537, 0
        %1763 = vmatpush.bf16.msra.mxu0 %v1722
        %1764 = vmatpush.bf16.msra.mxu0 %v1721
        %1765 = vmatpush.bf16.msra.mxu0 %v1720
        %1766 = vmatpush.bf16.msra.mxu0 %v1719
        %1767 = vmatpush.bf16.msra.mxu0 %v1718
        %1768 = vmatpush.bf16.msra.mxu0 %v1717
        %1769 = vmatpush.bf16.msra.mxu0 %v1716
        %1770 = vmatpush.bf16.msra.mxu0 %v1715
        %1771 = vmatmul.bf16.gmra.mxu0 %v1562
        %v1772 = vpop.f32.mrf.mxu0
        %v1773 = vadd.f32 %v1642, %v1772
        %v1774 = vpop.f32.mrf.mxu0
        %v1775 = vadd.f32 %v1642, %v1774
        %1776 = vmatmul.bf16.gmra.mxu0 %v1565
        %v1777 = vpop.f32.mrf.mxu0
        %v1778 = vadd.f32 %v1642, %v1777
        %v1779 = vpop.f32.mrf.mxu0
        %v1780 = vadd.f32 %v1642, %v1779
        %1781 = vmatmul.bf16.gmra.mxu0 %v1568
        %v1782 = vpop.f32.mrf.mxu0
        %v1783 = vadd.f32 %v1642, %v1782
        %v1784 = vpop.f32.mrf.mxu0
        %v1785 = vadd.f32 %v1642, %v1784
        %1786 = vmatmul.bf16.gmra.mxu0 %v1571
        %v1787 = vpop.f32.mrf.mxu0
        %v1788 = vadd.f32 %v1642, %v1787
        %v1789 = vpop.f32.mrf.mxu0
        %v1790 = vadd.f32 %v1642, %v1789
        %1791 = vdwg.mxu0
        %1792 = vmatpush.bf16.msra.mxu0 %v1730
        %1793 = vmatpush.bf16.msra.mxu0 %v1729
        %1794 = vmatpush.bf16.msra.mxu0 %v1728
        %1795 = vmatpush.bf16.msra.mxu0 %v1727
        %1796 = vmatpush.bf16.msra.mxu0 %v1726
        %1797 = vmatpush.bf16.msra.mxu0 %v1725
        %1798 = vmatpush.bf16.msra.mxu0 %v1724
        %1799 = vmatpush.bf16.msra.mxu0 %v1723
        %1800 = vmatmul.bf16.gmra.mxu0 %v1594
        %v1801 = vpop.f32.mrf.mxu0
        %v1802 = vadd.f32 %v1773, %v1801
        %v1803 = vpop.f32.mrf.mxu0
        %v1804 = vadd.f32 %v1775, %v1803
        %1805 = vmatmul.bf16.gmra.mxu0 %v1597
        %v1806 = vpop.f32.mrf.mxu0
        %v1807 = vadd.f32 %v1778, %v1806
        %v1808 = vpop.f32.mrf.mxu0
        %v1809 = vadd.f32 %v1780, %v1808
        %1810 = vmatmul.bf16.gmra.mxu0 %v1600
        %v1811 = vpop.f32.mrf.mxu0
        %v1812 = vadd.f32 %v1783, %v1811
        %v1813 = vpop.f32.mrf.mxu0
        %v1814 = vadd.f32 %v1785, %v1813
        %1815 = vmatmul.bf16.gmra.mxu0 %v1603
        %v1816 = vpop.f32.mrf.mxu0
        %v1817 = vadd.f32 %v1788, %v1816
        %v1818 = vpop.f32.mrf.mxu0
        %v1819 = vadd.f32 %v1790, %v1818
        %1820 = vdwg.mxu0
        %1821 = vmatpush.bf16.msra.mxu0 0
        %1822 = vmatpush.bf16.msra.mxu0 0
        %1823 = vmatpush.bf16.msra.mxu0 0
        %1824 = vmatpush.bf16.msra.mxu0 0
        %1825 = vmatpush.bf16.msra.mxu0 0
        %1826 = vmatpush.bf16.msra.mxu0 0
        %1827 = vmatpush.bf16.msra.mxu0 %v1732
        %1828 = vmatpush.bf16.msra.mxu0 %v1731
        %1829 = vmatmul.bf16.gmra.mxu0 %v1752
        %v1830 = vpop.f32.mrf.mxu0
        %v1831 = vadd.f32 %v1802, %v1830
        %v1832 = vpop.f32.mrf.mxu0
        %v1833 = vadd.f32 %v1804, %v1832
        %1834 = vmatmul.bf16.gmra.mxu0 %v1755
        %v1835 = vpop.f32.mrf.mxu0
        %v1836 = vadd.f32 %v1807, %v1835
        %v1837 = vpop.f32.mrf.mxu0
        %v1838 = vadd.f32 %v1809, %v1837
        %1839 = vmatmul.bf16.gmra.mxu0 %v1758
        %v1840 = vpop.f32.mrf.mxu0
        %v1841 = vadd.f32 %v1812, %v1840
        %v1842 = vpop.f32.mrf.mxu0
        %v1843 = vadd.f32 %v1814, %v1842
        %1844 = vmatmul.bf16.gmra.mxu0 %v1761
        %v1845 = vpop.f32.mrf.mxu0
        %v1846 = vadd.f32 %v1817, %v1845
        %v1847 = vpop.f32.mrf.mxu0
        %v1848 = vadd.f32 %v1819, %v1847
        %1849 = vdwg.mxu0
        %v1850 = vmax.f32 %v1831, 0.0
        %v1851 = vmax.f32 %v1833, 0.0
        %v1852 = vmax.f32 %v1836, 0.0
        %v1853 = vmax.f32 %v1838, 0.0
        %v1854 = vmax.f32 %v1841, 0.0
        %v1855 = vmax.f32 %v1843, 0.0
        %v1856 = vmax.f32 %v1846, 0.0
        %v1857 = vmax.f32 %v1848, 0.0
        %v1858 = vpack.c.bf16 %v1850, %v1850
        %v1859 = vpack.c.bf16 %v1851, %v1851
        %v1860 = vpack.c.bf16 %v1852, %v1852
        %v1861 = vpack.c.bf16 %v1853, %v1853
        %v1862 = vpack.c.bf16 %v1854, %v1854
        %v1863 = vpack.c.bf16 %v1855, %v1855
        %v1864 = vpack.c.bf16 %v1856, %v1856
        %v1865 = vpack.c.bf16 %v1857, %v1857
        %1866 = vst [vmem:[#allocation3] sm:$0xf] %v1858
        %1867 = vst [vmem:[#allocation3 + $0x4] sm:$0xf] %v1859
        %1868 = vst [vmem:[#allocation3 + $0x8] sm:$0xf] %v1860
        %1869 = vst [vmem:[#allocation3 + $0xc] sm:$0xf] %v1861
        %1870 = vst [vmem:[#allocation3 + $0x10] sm:$0xf] %v1862
        %1871 = vst [vmem:[#allocation3 + $0x14] sm:$0xf] %v1863
        %1872 = vst [vmem:[#allocation3 + $0x18] sm:$0xf] %v1864
        %1873 = vst [vmem:[#allocation3 + $0x1c] sm:$0xf] %v1865
        %v1874 = vadd.f32 %v1850, %v1851
        %v1875 = vadd.f32 %v1874, %v1852
        %v1876 = vadd.f32 %v1875, %v1853
        %v1877 = vadd.f32 %v1876, %v1854
        %v1878 = vadd.f32 %v1877, %v1855
        %v1879 = vadd.f32 %v1878, %v1856
        %v1880 = vadd.f32 %v1879, %v1857
        %v1881 = vrot.slane %v1880, 4
        %v1882 = vadd.f32 %v1880, %v1881
        %v1883 = vrot.slane %v1882, 2
        %v1884 = vadd.f32 %v1882, %v1883
        %v1885 = vrot.slane %v1884, 1
        %v1886 = vadd.f32 %v1884, %v1885
        %v1887 = vadd.f32 %v1886, 0.0
        %v1888 = vld [vmem:[#allocation2] sm:$0xf]
        %v1889 = vld [vmem:[#allocation2 + $0x8] sm:$0xf]
        %v1890 = vld [vmem:[#allocation2 + $0x10] sm:$0xf]
        %v1891 = vld [vmem:[#allocation2 + $0x18] sm:$0xf]
        %v1892 = vld [vmem:[#allocation2 + $0x20] sm:$0xf]
        %v1893 = vld [vmem:[#allocation2 + $0x28] sm:$0xf]
        %v1894 = vld [vmem:[#allocation2 + $0x30] sm:$0xf]
        %v1895 = vld [vmem:[#allocation2 + $0x38] sm:$0xf]
        %v1896 = vld [vmem:[#allocation2] sm:$0xe]
        %v1897 = vld [vmem:[#allocation2 + $0x4] sm:$0x1]
        %v1898 = vld [vmem:[#allocation2 + $0x8] sm:$0xe]
        %v1899 = vld [vmem:[#allocation2 + $0xc] sm:$0x1]
        %v1900 = vld [vmem:[#allocation2 + $0x10] sm:$0xe]
        %v1901 = vld [vmem:[#allocation2 + $0x14] sm:$0x1]
        %v1902 = vld [vmem:[#allocation2 + $0x18] sm:$0xe]
        %v1903 = vld [vmem:[#allocation2 + $0x1c] sm:$0x1]
        %v1904 = vld [vmem:[#allocation2 + $0x20] sm:$0xe]
        %v1905 = vld [vmem:[#allocation2 + $0x24] sm:$0x1]
        %v1906 = vld [vmem:[#allocation2 + $0x28] sm:$0xe]
        %v1907 = vld [vmem:[#allocation2 + $0x2c] sm:$0x1]
        %v1908 = vld [vmem:[#allocation2 + $0x30] sm:$0xe]
        %v1909 = vld [vmem:[#allocation2 + $0x34] sm:$0x1]
        %v1910 = vld [vmem:[#allocation2 + $0x38] sm:$0xe]
        %v1911 = vld [vmem:[#allocation2 + $0x3c] sm:$0x1]
        %v1928 = vrot.slane %v1896, 5
        %v1929 = vrot.slane %v1928, 4
        %v1930 = vrot.slane %v1897, 5
        %v1931 = vsel %vm521, %v1929, %v1930
        %v1932 = vrot.slane %v1898, 5
        %v1933 = vrot.slane %v1932, 4
        %v1934 = vrot.slane %v1899, 5
        %v1935 = vsel %vm521, %v1933, %v1934
        %v1936 = vrot.slane %v1900, 5
        %v1937 = vrot.slane %v1936, 4
        %v1938 = vrot.slane %v1901, 5
        %v1939 = vsel %vm521, %v1937, %v1938
        %v1940 = vrot.slane %v1902, 5
        %v1941 = vrot.slane %v1940, 4
        %v1942 = vrot.slane %v1903, 5
        %v1943 = vsel %vm521, %v1941, %v1942
        %v1944 = vrot.slane %v1904, 5
        %v1945 = vrot.slane %v1944, 4
        %v1946 = vrot.slane %v1905, 5
        %v1947 = vsel %vm521, %v1945, %v1946
        %v1948 = vrot.slane %v1906, 5
        %v1949 = vrot.slane %v1948, 4
        %v1950 = vrot.slane %v1907, 5
        %v1951 = vsel %vm521, %v1949, %v1950
        %v1952 = vrot.slane %v1908, 5
        %v1953 = vrot.slane %v1952, 4
        %v1954 = vrot.slane %v1909, 5
        %v1955 = vsel %vm521, %v1953, %v1954
        %v1956 = vrot.slane %v1910, 5
        %v1957 = vrot.slane %v1956, 4
        %v1958 = vrot.slane %v1911, 5
        %v1959 = vsel %vm521, %v1957, %v1958
        %v1960 = vld [vmem:[#allocation2] sm:$0xc]
        %v1961 = vld [vmem:[#allocation2 + $0x4] sm:$0x3]
        %v1962 = vld [vmem:[#allocation2 + $0x8] sm:$0xc]
        %v1963 = vld [vmem:[#allocation2 + $0xc] sm:$0x3]
        %v1964 = vld [vmem:[#allocation2 + $0x10] sm:$0xc]
        %v1965 = vld [vmem:[#allocation2 + $0x14] sm:$0x3]
        %v1966 = vld [vmem:[#allocation2 + $0x18] sm:$0xc]
        %v1967 = vld [vmem:[#allocation2 + $0x1c] sm:$0x3]
        %v1968 = vld [vmem:[#allocation2 + $0x20] sm:$0xc]
        %v1969 = vld [vmem:[#allocation2 + $0x24] sm:$0x3]
        %v1970 = vld [vmem:[#allocation2 + $0x28] sm:$0xc]
        %v1971 = vld [vmem:[#allocation2 + $0x2c] sm:$0x3]
        %v1972 = vld [vmem:[#allocation2 + $0x30] sm:$0xc]
        %v1973 = vld [vmem:[#allocation2 + $0x34] sm:$0x3]
        %v1974 = vld [vmem:[#allocation2 + $0x38] sm:$0xc]
        %v1975 = vld [vmem:[#allocation2 + $0x3c] sm:$0x3]
        %vm1992 = vcmask 1041408
        %vm1993 = vcmask 1045508
        %vm1994 = vmor %vm1992, %vm1993
        %v1995 = vrot.slane %v1960, 6
        %v1996 = vrot.slane %v1995, 4
        %v1997 = vrot.slane %v1961, 6
        %v1998 = vsel %vm1994, %v1996, %v1997
        %v1999 = vrot.slane %v1962, 6
        %v2000 = vrot.slane %v1999, 4
        %v2001 = vrot.slane %v1963, 6
        %v2002 = vsel %vm1994, %v2000, %v2001
        %v2003 = vrot.slane %v1964, 6
        %v2004 = vrot.slane %v2003, 4
        %v2005 = vrot.slane %v1965, 6
        %v2006 = vsel %vm1994, %v2004, %v2005
        %v2007 = vrot.slane %v1966, 6
        %v2008 = vrot.slane %v2007, 4
        %v2009 = vrot.slane %v1967, 6
        %v2010 = vsel %vm1994, %v2008, %v2009
        %v2011 = vrot.slane %v1968, 6
        %v2012 = vrot.slane %v2011, 4
        %v2013 = vrot.slane %v1969, 6
        %v2014 = vsel %vm1994, %v2012, %v2013
        %v2015 = vrot.slane %v1970, 6
        %v2016 = vrot.slane %v2015, 4
        %v2017 = vrot.slane %v1971, 6
        %v2018 = vsel %vm1994, %v2016, %v2017
        %v2019 = vrot.slane %v1972, 6
        %v2020 = vrot.slane %v2019, 4
        %v2021 = vrot.slane %v1973, 6
        %v2022 = vsel %vm1994, %v2020, %v2021
        %v2023 = vrot.slane %v1974, 6
        %v2024 = vrot.slane %v2023, 4
        %v2025 = vrot.slane %v1975, 6
        %v2026 = vsel %vm1994, %v2024, %v2025
        %v2027 = vld [vmem:[%s279] sm:$0xf]
        %v2028 = vld [vmem:[%s279 + $0x8] sm:$0xf]
        %v2029 = vld [vmem:[%s279 + $0x10] sm:$0xf]
        %v2030 = vld [vmem:[%s279 + $0x18] sm:$0xf]
        %v2031 = vld [vmem:[%s279 + $0x20] sm:$0xf]
        %v2032 = vld [vmem:[%s279 + $0x28] sm:$0xf]
        %v2033 = vld [vmem:[%s279 + $0x30] sm:$0xf]
        %v2034 = vld [vmem:[%s279 + $0x38] sm:$0xf]
        %v2035 = vld [vmem:[%s279] sm:$0xe]
        %v2036 = vld [vmem:[%s279 + $0x4] sm:$0x1]
        %v2037 = vld [vmem:[%s279 + $0x8] sm:$0xe]
        %v2038 = vld [vmem:[%s279 + $0xc] sm:$0x1]
        %v2039 = vld [vmem:[%s279 + $0x10] sm:$0xe]
        %v2040 = vld [vmem:[%s279 + $0x14] sm:$0x1]
        %v2041 = vld [vmem:[%s279 + $0x18] sm:$0xe]
        %v2042 = vld [vmem:[%s279 + $0x1c] sm:$0x1]
        %v2043 = vld [vmem:[%s279 + $0x20] sm:$0xe]
        %v2044 = vld [vmem:[%s279 + $0x24] sm:$0x1]
        %v2045 = vld [vmem:[%s279 + $0x28] sm:$0xe]
        %v2046 = vld [vmem:[%s279 + $0x2c] sm:$0x1]
        %v2047 = vld [vmem:[%s279 + $0x30] sm:$0xe]
        %v2048 = vld [vmem:[%s279 + $0x34] sm:$0x1]
        %v2049 = vld [vmem:[%s279 + $0x38] sm:$0xe]
        %v2050 = vld [vmem:[%s279 + $0x3c] sm:$0x1]
        %v2067 = vrot.slane %v2035, 5
        %v2068 = vrot.slane %v2067, 4
        %v2069 = vrot.slane %v2036, 5
        %v2070 = vsel %vm521, %v2068, %v2069
        %v2071 = vrot.slane %v2037, 5
        %v2072 = vrot.slane %v2071, 4
        %v2073 = vrot.slane %v2038, 5
        %v2074 = vsel %vm521, %v2072, %v2073
        %v2075 = vrot.slane %v2039, 5
        %v2076 = vrot.slane %v2075, 4
        %v2077 = vrot.slane %v2040, 5
        %v2078 = vsel %vm521, %v2076, %v2077
        %v2079 = vrot.slane %v2041, 5
        %v2080 = vrot.slane %v2079, 4
        %v2081 = vrot.slane %v2042, 5
        %v2082 = vsel %vm521, %v2080, %v2081
        %v2083 = vrot.slane %v2043, 5
        %v2084 = vrot.slane %v2083, 4
        %v2085 = vrot.slane %v2044, 5
        %v2086 = vsel %vm521, %v2084, %v2085
        %v2087 = vrot.slane %v2045, 5
        %v2088 = vrot.slane %v2087, 4
        %v2089 = vrot.slane %v2046, 5
        %v2090 = vsel %vm521, %v2088, %v2089
        %v2091 = vrot.slane %v2047, 5
        %v2092 = vrot.slane %v2091, 4
        %v2093 = vrot.slane %v2048, 5
        %v2094 = vsel %vm521, %v2092, %v2093
        %v2095 = vrot.slane %v2049, 5
        %v2096 = vrot.slane %v2095, 4
        %v2097 = vrot.slane %v2050, 5
        %v2098 = vsel %vm521, %v2096, %v2097
        %v2099 = vld [vmem:[%s279] sm:$0xc]
        %v2100 = vld [vmem:[%s279 + $0x4] sm:$0x3]
        %v2101 = vld [vmem:[%s279 + $0x8] sm:$0xc]
        %v2102 = vld [vmem:[%s279 + $0xc] sm:$0x3]
        %v2103 = vld [vmem:[%s279 + $0x10] sm:$0xc]
        %v2104 = vld [vmem:[%s279 + $0x14] sm:$0x3]
        %v2105 = vld [vmem:[%s279 + $0x18] sm:$0xc]
        %v2106 = vld [vmem:[%s279 + $0x1c] sm:$0x3]
        %v2107 = vld [vmem:[%s279 + $0x20] sm:$0xc]
        %v2108 = vld [vmem:[%s279 + $0x24] sm:$0x3]
        %v2109 = vld [vmem:[%s279 + $0x28] sm:$0xc]
        %v2110 = vld [vmem:[%s279 + $0x2c] sm:$0x3]
        %v2111 = vld [vmem:[%s279 + $0x30] sm:$0xc]
        %v2112 = vld [vmem:[%s279 + $0x34] sm:$0x3]
        %v2113 = vld [vmem:[%s279 + $0x38] sm:$0xc]
        %v2114 = vld [vmem:[%s279 + $0x3c] sm:$0x3]
        %v2131 = vrot.slane %v2099, 6
        %v2132 = vrot.slane %v2131, 4
        %v2133 = vrot.slane %v2100, 6
        %v2134 = vsel %vm1994, %v2132, %v2133
        %v2135 = vrot.slane %v2101, 6
        %v2136 = vrot.slane %v2135, 4
        %v2137 = vrot.slane %v2102, 6
        %v2138 = vsel %vm1994, %v2136, %v2137
        %v2139 = vrot.slane %v2103, 6
        %v2140 = vrot.slane %v2139, 4
        %v2141 = vrot.slane %v2104, 6
        %v2142 = vsel %vm1994, %v2140, %v2141
        %v2143 = vrot.slane %v2105, 6
        %v2144 = vrot.slane %v2143, 4
        %v2145 = vrot.slane %v2106, 6
        %v2146 = vsel %vm1994, %v2144, %v2145
        %v2147 = vrot.slane %v2107, 6
        %v2148 = vrot.slane %v2147, 4
        %v2149 = vrot.slane %v2108, 6
        %v2150 = vsel %vm1994, %v2148, %v2149
        %v2151 = vrot.slane %v2109, 6
        %v2152 = vrot.slane %v2151, 4
        %v2153 = vrot.slane %v2110, 6
        %v2154 = vsel %vm1994, %v2152, %v2153
        %v2155 = vrot.slane %v2111, 6
        %v2156 = vrot.slane %v2155, 4
        %v2157 = vrot.slane %v2112, 6
        %v2158 = vsel %vm1994, %v2156, %v2157
        %v2159 = vrot.slane %v2113, 6
        %v2160 = vrot.slane %v2159, 4
        %v2161 = vrot.slane %v2114, 6
        %v2162 = vsel %vm1994, %v2160, %v2161
        %s2163 = scalar_lea.vmem [#allocation2], 32
        %v2164 = vld [vmem:[%s2163] sm:$0xf]
        %v2165 = vld [vmem:[%s2163 + $0x8] sm:$0xf]
        %v2166 = vld [vmem:[%s2163 + $0x10] sm:$0xf]
        %v2167 = vld [vmem:[%s2163 + $0x18] sm:$0xf]
        %v2168 = vld [vmem:[%s2163 + $0x20] sm:$0xf]
        %v2169 = vld [vmem:[%s2163 + $0x28] sm:$0xf]
        %v2170 = vld [vmem:[%s2163 + $0x30] sm:$0xf]
        %v2171 = vld [vmem:[%s2163 + $0x38] sm:$0xf]
        %v2172 = vld [vmem:[%s2163] sm:$0xe]
        %v2173 = vld [vmem:[%s2163 + $0x4] sm:$0x1]
        %v2174 = vld [vmem:[%s2163 + $0x8] sm:$0xe]
        %v2175 = vld [vmem:[%s2163 + $0xc] sm:$0x1]
        %v2176 = vld [vmem:[%s2163 + $0x10] sm:$0xe]
        %v2177 = vld [vmem:[%s2163 + $0x14] sm:$0x1]
        %v2178 = vld [vmem:[%s2163 + $0x18] sm:$0xe]
        %v2179 = vld [vmem:[%s2163 + $0x1c] sm:$0x1]
        %v2180 = vld [vmem:[%s2163 + $0x20] sm:$0xe]
        %v2181 = vld [vmem:[%s2163 + $0x24] sm:$0x1]
        %v2182 = vld [vmem:[%s2163 + $0x28] sm:$0xe]
        %v2183 = vld [vmem:[%s2163 + $0x2c] sm:$0x1]
        %v2184 = vld [vmem:[%s2163 + $0x30] sm:$0xe]
        %v2185 = vld [vmem:[%s2163 + $0x34] sm:$0x1]
        %v2186 = vld [vmem:[%s2163 + $0x38] sm:$0xe]
        %v2187 = vld [vmem:[%s2163 + $0x3c] sm:$0x1]
        %v2204 = vrot.slane %v2172, 5
        %v2205 = vrot.slane %v2204, 4
        %v2206 = vrot.slane %v2173, 5
        %v2207 = vsel %vm521, %v2205, %v2206
        %v2208 = vrot.slane %v2174, 5
        %v2209 = vrot.slane %v2208, 4
        %v2210 = vrot.slane %v2175, 5
        %v2211 = vsel %vm521, %v2209, %v2210
        %v2212 = vrot.slane %v2176, 5
        %v2213 = vrot.slane %v2212, 4
        %v2214 = vrot.slane %v2177, 5
        %v2215 = vsel %vm521, %v2213, %v2214
        %v2216 = vrot.slane %v2178, 5
        %v2217 = vrot.slane %v2216, 4
        %v2218 = vrot.slane %v2179, 5
        %v2219 = vsel %vm521, %v2217, %v2218
        %v2220 = vrot.slane %v2180, 5
        %v2221 = vrot.slane %v2220, 4
        %v2222 = vrot.slane %v2181, 5
        %v2223 = vsel %vm521, %v2221, %v2222
        %v2224 = vrot.slane %v2182, 5
        %v2225 = vrot.slane %v2224, 4
        %v2226 = vrot.slane %v2183, 5
        %v2227 = vsel %vm521, %v2225, %v2226
        %v2228 = vrot.slane %v2184, 5
        %v2229 = vrot.slane %v2228, 4
        %v2230 = vrot.slane %v2185, 5
        %v2231 = vsel %vm521, %v2229, %v2230
        %v2232 = vrot.slane %v2186, 5
        %v2233 = vrot.slane %v2232, 4
        %v2234 = vrot.slane %v2187, 5
        %v2235 = vsel %vm521, %v2233, %v2234
        %v2236 = vld [vmem:[%s2163] sm:$0xc]
        %v2237 = vld [vmem:[%s2163 + $0x4] sm:$0x3]
        %v2238 = vld [vmem:[%s2163 + $0x8] sm:$0xc]
        %v2239 = vld [vmem:[%s2163 + $0xc] sm:$0x3]
        %v2240 = vld [vmem:[%s2163 + $0x10] sm:$0xc]
        %v2241 = vld [vmem:[%s2163 + $0x14] sm:$0x3]
        %v2242 = vld [vmem:[%s2163 + $0x18] sm:$0xc]
        %v2243 = vld [vmem:[%s2163 + $0x1c] sm:$0x3]
        %v2244 = vld [vmem:[%s2163 + $0x20] sm:$0xc]
        %v2245 = vld [vmem:[%s2163 + $0x24] sm:$0x3]
        %v2246 = vld [vmem:[%s2163 + $0x28] sm:$0xc]
        %v2247 = vld [vmem:[%s2163 + $0x2c] sm:$0x3]
        %v2248 = vld [vmem:[%s2163 + $0x30] sm:$0xc]
        %v2249 = vld [vmem:[%s2163 + $0x34] sm:$0x3]
        %v2250 = vld [vmem:[%s2163 + $0x38] sm:$0xc]
        %v2251 = vld [vmem:[%s2163 + $0x3c] sm:$0x3]
        %v2268 = vrot.slane %v2236, 6
        %v2269 = vrot.slane %v2268, 4
        %v2270 = vrot.slane %v2237, 6
        %v2271 = vsel %vm1994, %v2269, %v2270
        %v2272 = vrot.slane %v2238, 6
        %v2273 = vrot.slane %v2272, 4
        %v2274 = vrot.slane %v2239, 6
        %v2275 = vsel %vm1994, %v2273, %v2274
        %v2276 = vrot.slane %v2240, 6
        %v2277 = vrot.slane %v2276, 4
        %v2278 = vrot.slane %v2241, 6
        %v2279 = vsel %vm1994, %v2277, %v2278
        %v2280 = vrot.slane %v2242, 6
        %v2281 = vrot.slane %v2280, 4
        %v2282 = vrot.slane %v2243, 6
        %v2283 = vsel %vm1994, %v2281, %v2282
        %v2284 = vrot.slane %v2244, 6
        %v2285 = vrot.slane %v2284, 4
        %v2286 = vrot.slane %v2245, 6
        %v2287 = vsel %vm1994, %v2285, %v2286
        %v2288 = vrot.slane %v2246, 6
        %v2289 = vrot.slane %v2288, 4
        %v2290 = vrot.slane %v2247, 6
        %v2291 = vsel %vm1994, %v2289, %v2290
        %v2292 = vrot.slane %v2248, 6
        %v2293 = vrot.slane %v2292, 4
        %v2294 = vrot.slane %v2249, 6
        %v2295 = vsel %vm1994, %v2293, %v2294
        %v2296 = vrot.slane %v2250, 6
        %v2297 = vrot.slane %v2296, 4
        %v2298 = vrot.slane %v2251, 6
        %v2299 = vsel %vm1994, %v2297, %v2298
        %v2308 = vunpack.c.l.b16 %v1888
        %v2309 = vunpack.c.l.b16 %v1889
        %v2310 = vunpack.c.l.b16 %v1890
        %v2311 = vunpack.c.l.b16 %v1891
        %v2312 = vunpack.c.l.b16 %v1892
        %v2313 = vunpack.c.l.b16 %v1893
        %v2314 = vunpack.c.l.b16 %v1894
        %v2315 = vunpack.c.l.b16 %v1895
        %v2316 = vpack.c.b16 %v2309, %v2308
        %v2317 = vpack.c.b16 %v2311, %v2310
        %v2318 = vpack.c.b16 %v2313, %v2312
        %v2319 = vpack.c.b16 %v2315, %v2314
        %v2320 = vunpack.c.l.b16 %v1931
        %v2321 = vunpack.c.l.b16 %v1935
        %v2322 = vunpack.c.l.b16 %v1939
        %v2323 = vunpack.c.l.b16 %v1943
        %v2324 = vunpack.c.l.b16 %v1947
        %v2325 = vunpack.c.l.b16 %v1951
        %v2326 = vunpack.c.l.b16 %v1955
        %v2327 = vunpack.c.l.b16 %v1959
        %v2328 = vpack.c.b16 %v2321, %v2320
        %v2329 = vpack.c.b16 %v2323, %v2322
        %v2330 = vpack.c.b16 %v2325, %v2324
        %v2331 = vpack.c.b16 %v2327, %v2326
        %2332 = vrot.lane.b32.xlu0 %v2328, 32
        %v2333 = vpop.permute.xlu0 %2332
        %2334 = vrot.lane.b32.xlu0 %v2329, 32
        %v2335 = vpop.permute.xlu0 %2334
        %2336 = vrot.lane.b32.xlu0 %v2330, 32
        %v2337 = vpop.permute.xlu0 %2336
        %2338 = vrot.lane.b32.xlu0 %v2331, 32
        %v2339 = vpop.permute.xlu0 %2338
        %v2340 = vunpack.c.l.b16 %v1998
        %v2341 = vunpack.c.l.b16 %v2002
        %v2342 = vunpack.c.l.b16 %v2006
        %v2343 = vunpack.c.l.b16 %v2010
        %v2344 = vunpack.c.l.b16 %v2014
        %v2345 = vunpack.c.l.b16 %v2018
        %v2346 = vunpack.c.l.b16 %v2022
        %v2347 = vunpack.c.l.b16 %v2026
        %v2348 = vpack.c.b16 %v2341, %v2340
        %v2349 = vpack.c.b16 %v2343, %v2342
        %v2350 = vpack.c.b16 %v2345, %v2344
        %v2351 = vpack.c.b16 %v2347, %v2346
        %2352 = vrot.lane.b32.xlu0 %v2348, 64
        %v2353 = vpop.permute.xlu0 %2352
        %2354 = vrot.lane.b32.xlu0 %v2349, 64
        %v2355 = vpop.permute.xlu0 %2354
        %2356 = vrot.lane.b32.xlu0 %v2350, 64
        %v2357 = vpop.permute.xlu0 %2356
        %2358 = vrot.lane.b32.xlu0 %v2351, 64
        %v2359 = vpop.permute.xlu0 %2358
        %v2368 = vunpack.c.l.b16 %v2027
        %v2369 = vunpack.c.l.b16 %v2028
        %v2370 = vunpack.c.l.b16 %v2029
        %v2371 = vunpack.c.l.b16 %v2030
        %v2372 = vunpack.c.l.b16 %v2031
        %v2373 = vunpack.c.l.b16 %v2032
        %v2374 = vunpack.c.l.b16 %v2033
        %v2375 = vunpack.c.l.b16 %v2034
        %v2376 = vpack.c.b16 %v2369, %v2368
        %v2377 = vpack.c.b16 %v2371, %v2370
        %v2378 = vpack.c.b16 %v2373, %v2372
        %v2379 = vpack.c.b16 %v2375, %v2374
        %2380 = vrot.lane.b32.xlu0 %v2376, 96
        %v2381 = vpop.permute.xlu0 %2380
        %2382 = vrot.lane.b32.xlu0 %v2377, 96
        %v2383 = vpop.permute.xlu0 %2382
        %2384 = vrot.lane.b32.xlu0 %v2378, 96
        %v2385 = vpop.permute.xlu0 %2384
        %2386 = vrot.lane.b32.xlu0 %v2379, 96
        %v2387 = vpop.permute.xlu0 %2386
        %v2388 = vunpack.c.l.b16 %v2070
        %v2389 = vunpack.c.l.b16 %v2074
        %v2390 = vunpack.c.l.b16 %v2078
        %v2391 = vunpack.c.l.b16 %v2082
        %v2392 = vunpack.c.l.b16 %v2086
        %v2393 = vunpack.c.l.b16 %v2090
        %v2394 = vunpack.c.l.b16 %v2094
        %v2395 = vunpack.c.l.b16 %v2098
        %v2396 = vpack.c.b16 %v2389, %v2388
        %v2397 = vpack.c.b16 %v2391, %v2390
        %v2398 = vpack.c.b16 %v2393, %v2392
        %v2399 = vpack.c.b16 %v2395, %v2394
        %v2400 = vunpack.c.l.b16 %v2134
        %v2401 = vunpack.c.l.b16 %v2138
        %v2402 = vunpack.c.l.b16 %v2142
        %v2403 = vunpack.c.l.b16 %v2146
        %v2404 = vunpack.c.l.b16 %v2150
        %v2405 = vunpack.c.l.b16 %v2154
        %v2406 = vunpack.c.l.b16 %v2158
        %v2407 = vunpack.c.l.b16 %v2162
        %v2408 = vpack.c.b16 %v2401, %v2400
        %v2409 = vpack.c.b16 %v2403, %v2402
        %v2410 = vpack.c.b16 %v2405, %v2404
        %v2411 = vpack.c.b16 %v2407, %v2406
        %2412 = vrot.lane.b32.xlu0 %v2408, 32
        %v2413 = vpop.permute.xlu0 %2412
        %2414 = vrot.lane.b32.xlu0 %v2409, 32
        %v2415 = vpop.permute.xlu0 %2414
        %2416 = vrot.lane.b32.xlu0 %v2410, 32
        %v2417 = vpop.permute.xlu0 %2416
        %2418 = vrot.lane.b32.xlu0 %v2411, 32
        %v2419 = vpop.permute.xlu0 %2418
        %v2428 = vunpack.c.l.b16 %v2164
        %v2429 = vunpack.c.l.b16 %v2165
        %v2430 = vunpack.c.l.b16 %v2166
        %v2431 = vunpack.c.l.b16 %v2167
        %v2432 = vunpack.c.l.b16 %v2168
        %v2433 = vunpack.c.l.b16 %v2169
        %v2434 = vunpack.c.l.b16 %v2170
        %v2435 = vunpack.c.l.b16 %v2171
        %v2436 = vpack.c.b16 %v2429, %v2428
        %v2437 = vpack.c.b16 %v2431, %v2430
        %v2438 = vpack.c.b16 %v2433, %v2432
        %v2439 = vpack.c.b16 %v2435, %v2434
        %2440 = vrot.lane.b32.xlu0 %v2436, 64
        %v2441 = vpop.permute.xlu0 %2440
        %2442 = vrot.lane.b32.xlu0 %v2437, 64
        %v2443 = vpop.permute.xlu0 %2442
        %2444 = vrot.lane.b32.xlu0 %v2438, 64
        %v2445 = vpop.permute.xlu0 %2444
        %2446 = vrot.lane.b32.xlu0 %v2439, 64
        %v2447 = vpop.permute.xlu0 %2446
        %v2448 = vunpack.c.l.b16 %v2207
        %v2449 = vunpack.c.l.b16 %v2211
        %v2450 = vunpack.c.l.b16 %v2215
        %v2451 = vunpack.c.l.b16 %v2219
        %v2452 = vunpack.c.l.b16 %v2223
        %v2453 = vunpack.c.l.b16 %v2227
        %v2454 = vunpack.c.l.b16 %v2231
        %v2455 = vunpack.c.l.b16 %v2235
        %v2456 = vpack.c.b16 %v2449, %v2448
        %v2457 = vpack.c.b16 %v2451, %v2450
        %v2458 = vpack.c.b16 %v2453, %v2452
        %v2459 = vpack.c.b16 %v2455, %v2454
        %2460 = vrot.lane.b32.xlu0 %v2456, 96
        %v2461 = vpop.permute.xlu0 %2460
        %2462 = vrot.lane.b32.xlu0 %v2457, 96
        %v2463 = vpop.permute.xlu0 %2462
        %2464 = vrot.lane.b32.xlu0 %v2458, 96
        %v2465 = vpop.permute.xlu0 %2464
        %2466 = vrot.lane.b32.xlu0 %v2459, 96
        %v2467 = vpop.permute.xlu0 %2466
        %v2468 = vunpack.c.l.b16 %v2271
        %v2469 = vunpack.c.l.b16 %v2275
        %v2470 = vunpack.c.l.b16 %v2279
        %v2471 = vunpack.c.l.b16 %v2283
        %v2472 = vunpack.c.l.b16 %v2287
        %v2473 = vunpack.c.l.b16 %v2291
        %v2474 = vunpack.c.l.b16 %v2295
        %v2475 = vunpack.c.l.b16 %v2299
        %v2476 = vpack.c.b16 %v2469, %v2468
        %v2477 = vpack.c.b16 %v2471, %v2470
        %v2478 = vpack.c.b16 %v2473, %v2472
        %v2479 = vpack.c.b16 %v2475, %v2474
        %v2482 = vsel %vm1538, %v2316, %v2333
        %v2485 = vsel %vm1538, %v2317, %v2335
        %v2488 = vsel %vm1538, %v2318, %v2337
        %v2491 = vsel %vm1538, %v2319, %v2339
        %v2493 = vsel %vm1551, %v2482, %v2353
        %v2495 = vsel %vm1551, %v2485, %v2355
        %v2497 = vsel %vm1551, %v2488, %v2357
        %v2499 = vsel %vm1551, %v2491, %v2359
        %v2501 = vsel %vm1560, %v2493, %v2381
        %v2504 = vsel %vm1560, %v2495, %v2383
        %v2507 = vsel %vm1560, %v2497, %v2385
        %v2510 = vsel %vm1560, %v2499, %v2387
        %v2514 = vsel %vm1538, %v2396, %v2413
        %v2517 = vsel %vm1538, %v2397, %v2415
        %v2520 = vsel %vm1538, %v2398, %v2417
        %v2523 = vsel %vm1538, %v2399, %v2419
        %v2525 = vsel %vm1551, %v2514, %v2441
        %v2527 = vsel %vm1551, %v2517, %v2443
        %v2529 = vsel %vm1551, %v2520, %v2445
        %v2531 = vsel %vm1551, %v2523, %v2447
        %v2533 = vsel %vm1560, %v2525, %v2461
        %v2536 = vsel %vm1560, %v2527, %v2463
        %v2539 = vsel %vm1560, %v2529, %v2465
        %v2542 = vsel %vm1560, %v2531, %v2467
        %s2544 = scalar_lea.vmem [#allocation4], 144
        %v2545 = vld [vmem:[%s2544] sm:$0xf]
        %v2546 = vld [vmem:[%s2544 + $0x4] sm:$0xf]
        %v2547 = vld [vmem:[%s2544 + $0x8] sm:$0xf]
        %v2548 = vld [vmem:[%s2544 + $0xc] sm:$0xf]
        %v2549 = vld [vmem:[%s2544 + $0x10] sm:$0xf]
        %v2550 = vld [vmem:[%s2544 + $0x14] sm:$0xf]
        %v2551 = vld [vmem:[%s2544 + $0x18] sm:$0xf]
        %v2552 = vld [vmem:[%s2544 + $0x1c] sm:$0xf]
        %v2553 = vld [vmem:[%s2544 + $0x20] sm:$0xf]
        %v2554 = vld [vmem:[%s2544 + $0x24] sm:$0xf]
        %v2555 = vld [vmem:[%s2544 + $0x28] sm:$0xf]
        %v2556 = vld [vmem:[%s2544 + $0x2c] sm:$0xf]
        %v2557 = vld [vmem:[%s2544 + $0x30] sm:$0xf]
        %v2558 = vld [vmem:[%s2544 + $0x34] sm:$0xf]
        %v2559 = vld [vmem:[%s2544 + $0x38] sm:$0xf]
        %v2560 = vld [vmem:[%s2544 + $0x3c] sm:$0xf]
        %v2561 = vld [vmem:[%s2544 + $0x40] sm:$0xf]
        %v2562 = vld [vmem:[%s2544 + $0x44] sm:$0xf]
        %v2563 = vld [vmem:[%s2544 + $0x48] sm:$0xf]
        %v2564 = vld [vmem:[%s2544 + $0x4c] sm:$0xf]
        %v2565 = vld [vmem:[%s2544 + $0x50] sm:$0xf]
        %v2566 = vld [vmem:[%s2544 + $0x54] sm:$0xf]
        %v2567 = vld [vmem:[%s2544 + $0x58] sm:$0xf]
        %v2568 = vld [vmem:[%s2544 + $0x5c] sm:$0xf]
        %v2569 = vld [vmem:[%s2544 + $0x60] sm:$0xf]
        %v2570 = vld [vmem:[%s2544 + $0x64] sm:$0xf]
        %v2571 = vld [vmem:[%s2544 + $0x68] sm:$0xf]
        %v2572 = vld [vmem:[%s2544 + $0x6c] sm:$0xf]
        %v2573 = vld [vmem:[%s2544 + $0x70] sm:$0xf]
        %v2574 = vld [vmem:[%s2544 + $0x74] sm:$0xf]
        %v2575 = vld [vmem:[%s2544 + $0x78] sm:$0xf]
        %v2576 = vld [vmem:[%s2544 + $0x7c] sm:$0xf]
        %v2577 = vld [vmem:[%s2544 + $0x80] sm:$0xf]
        %v2578 = vld [vmem:[%s2544 + $0x84] sm:$0xf]
        %v2579 = vld [vmem:[%s2544 + $0x88] sm:$0xf]
        %v2580 = vld [vmem:[%s2544 + $0x8c] sm:$0xf]
        %v2581 = vld [vmem:[%s2 + $0x1] sm:$0x1]
        %v2582 = vperm.slane %v2581, 0
        %v2619 = vunpack.c.l.b16 %v2545
        %v2620 = vunpack.c.l.b16 %v2546
        %v2621 = vunpack.c.l.b16 %v2547
        %v2622 = vunpack.c.l.b16 %v2548
        %v2623 = vunpack.c.l.b16 %v2549
        %v2624 = vunpack.c.l.b16 %v2550
        %v2625 = vunpack.c.l.b16 %v2551
        %v2626 = vunpack.c.l.b16 %v2552
        %v2627 = vunpack.c.l.b16 %v2553
        %v2628 = vunpack.c.l.b16 %v2554
        %v2629 = vunpack.c.l.b16 %v2555
        %v2630 = vunpack.c.l.b16 %v2556
        %v2631 = vunpack.c.l.b16 %v2557
        %v2632 = vunpack.c.l.b16 %v2558
        %v2633 = vunpack.c.l.b16 %v2559
        %v2634 = vunpack.c.l.b16 %v2560
        %v2635 = vunpack.c.l.b16 %v2561
        %v2636 = vunpack.c.l.b16 %v2562
        %v2637 = vunpack.c.l.b16 %v2563
        %v2638 = vunpack.c.l.b16 %v2564
        %v2639 = vunpack.c.l.b16 %v2565
        %v2640 = vunpack.c.l.b16 %v2566
        %v2641 = vunpack.c.l.b16 %v2567
        %v2642 = vunpack.c.l.b16 %v2568
        %v2643 = vunpack.c.l.b16 %v2569
        %v2644 = vunpack.c.l.b16 %v2570
        %v2645 = vunpack.c.l.b16 %v2571
        %v2646 = vunpack.c.l.b16 %v2572
        %v2647 = vunpack.c.l.b16 %v2573
        %v2648 = vunpack.c.l.b16 %v2574
        %v2649 = vunpack.c.l.b16 %v2575
        %v2650 = vunpack.c.l.b16 %v2576
        %v2651 = vunpack.c.l.b16 %v2577
        %v2652 = vunpack.c.l.b16 %v2578
        %v2653 = vunpack.c.l.b16 %v2579
        %v2654 = vunpack.c.l.b16 %v2580
        %v2655 = vpack.c.b16 %v2620, %v2619
        %v2656 = vpack.c.b16 %v2622, %v2621
        %v2657 = vpack.c.b16 %v2624, %v2623
        %v2658 = vpack.c.b16 %v2626, %v2625
        %v2659 = vpack.c.b16 %v2628, %v2627
        %v2660 = vpack.c.b16 %v2630, %v2629
        %v2661 = vpack.c.b16 %v2632, %v2631
        %v2662 = vpack.c.b16 %v2634, %v2633
        %v2663 = vpack.c.b16 %v2636, %v2635
        %v2664 = vpack.c.b16 %v2638, %v2637
        %v2665 = vpack.c.b16 %v2640, %v2639
        %v2666 = vpack.c.b16 %v2642, %v2641
        %v2667 = vpack.c.b16 %v2644, %v2643
        %v2668 = vpack.c.b16 %v2646, %v2645
        %v2669 = vpack.c.b16 %v2648, %v2647
        %v2670 = vpack.c.b16 %v2650, %v2649
        %v2671 = vpack.c.b16 %v2652, %v2651
        %v2672 = vpack.c.b16 %v2654, %v2653
        %v2692 = vsel %vm1538, %v2476, 0
        %v2695 = vsel %vm1538, %v2477, 0
        %v2698 = vsel %vm1538, %v2478, 0
        %v2701 = vsel %vm1538, %v2479, 0
        %2703 = vmatpush.bf16.msra.mxu0 %v2662
        %2704 = vmatpush.bf16.msra.mxu0 %v2661
        %2705 = vmatpush.bf16.msra.mxu0 %v2660
        %2706 = vmatpush.bf16.msra.mxu0 %v2659
        %2707 = vmatpush.bf16.msra.mxu0 %v2658
        %2708 = vmatpush.bf16.msra.mxu0 %v2657
        %2709 = vmatpush.bf16.msra.mxu0 %v2656
        %2710 = vmatpush.bf16.msra.mxu0 %v2655
        %2711 = vmatmul.bf16.gmra.mxu0 %v2501
        %v2712 = vpop.f32.mrf.mxu0
        %v2713 = vadd.f32 %v2582, %v2712
        %v2714 = vpop.f32.mrf.mxu0
        %v2715 = vadd.f32 %v2582, %v2714
        %2716 = vmatmul.bf16.gmra.mxu0 %v2504
        %v2717 = vpop.f32.mrf.mxu0
        %v2718 = vadd.f32 %v2582, %v2717
        %v2719 = vpop.f32.mrf.mxu0
        %v2720 = vadd.f32 %v2582, %v2719
        %2721 = vmatmul.bf16.gmra.mxu0 %v2507
        %v2722 = vpop.f32.mrf.mxu0
        %v2723 = vadd.f32 %v2582, %v2722
        %v2724 = vpop.f32.mrf.mxu0
        %v2725 = vadd.f32 %v2582, %v2724
        %2726 = vmatmul.bf16.gmra.mxu0 %v2510
        %v2727 = vpop.f32.mrf.mxu0
        %v2728 = vadd.f32 %v2582, %v2727
        %v2729 = vpop.f32.mrf.mxu0
        %v2730 = vadd.f32 %v2582, %v2729
        %2731 = vdwg.mxu0
        %2732 = vmatpush.bf16.msra.mxu0 %v2670
        %2733 = vmatpush.bf16.msra.mxu0 %v2669
        %2734 = vmatpush.bf16.msra.mxu0 %v2668
        %2735 = vmatpush.bf16.msra.mxu0 %v2667
        %2736 = vmatpush.bf16.msra.mxu0 %v2666
        %2737 = vmatpush.bf16.msra.mxu0 %v2665
        %2738 = vmatpush.bf16.msra.mxu0 %v2664
        %2739 = vmatpush.bf16.msra.mxu0 %v2663
        %2740 = vmatmul.bf16.gmra.mxu0 %v2533
        %v2741 = vpop.f32.mrf.mxu0
        %v2742 = vadd.f32 %v2713, %v2741
        %v2743 = vpop.f32.mrf.mxu0
        %v2744 = vadd.f32 %v2715, %v2743
        %2745 = vmatmul.bf16.gmra.mxu0 %v2536
        %v2746 = vpop.f32.mrf.mxu0
        %v2747 = vadd.f32 %v2718, %v2746
        %v2748 = vpop.f32.mrf.mxu0
        %v2749 = vadd.f32 %v2720, %v2748
        %2750 = vmatmul.bf16.gmra.mxu0 %v2539
        %v2751 = vpop.f32.mrf.mxu0
        %v2752 = vadd.f32 %v2723, %v2751
        %v2753 = vpop.f32.mrf.mxu0
        %v2754 = vadd.f32 %v2725, %v2753
        %2755 = vmatmul.bf16.gmra.mxu0 %v2542
        %v2756 = vpop.f32.mrf.mxu0
        %v2757 = vadd.f32 %v2728, %v2756
        %v2758 = vpop.f32.mrf.mxu0
        %v2759 = vadd.f32 %v2730, %v2758
        %2760 = vdwg.mxu0
        %2761 = vmatpush.bf16.msra.mxu0 0
        %2762 = vmatpush.bf16.msra.mxu0 0
        %2763 = vmatpush.bf16.msra.mxu0 0
        %2764 = vmatpush.bf16.msra.mxu0 0
        %2765 = vmatpush.bf16.msra.mxu0 0
        %2766 = vmatpush.bf16.msra.mxu0 0
        %2767 = vmatpush.bf16.msra.mxu0 %v2672
        %2768 = vmatpush.bf16.msra.mxu0 %v2671
        %2769 = vmatmul.bf16.gmra.mxu0 %v2692
        %v2770 = vpop.f32.mrf.mxu0
        %v2771 = vadd.f32 %v2742, %v2770
        %v2772 = vpop.f32.mrf.mxu0
        %v2773 = vadd.f32 %v2744, %v2772
        %2774 = vmatmul.bf16.gmra.mxu0 %v2695
        %v2775 = vpop.f32.mrf.mxu0
        %v2776 = vadd.f32 %v2747, %v2775
        %v2777 = vpop.f32.mrf.mxu0
        %v2778 = vadd.f32 %v2749, %v2777
        %2779 = vmatmul.bf16.gmra.mxu0 %v2698
        %v2780 = vpop.f32.mrf.mxu0
        %v2781 = vadd.f32 %v2752, %v2780
        %v2782 = vpop.f32.mrf.mxu0
        %v2783 = vadd.f32 %v2754, %v2782
        %2784 = vmatmul.bf16.gmra.mxu0 %v2701
        %v2785 = vpop.f32.mrf.mxu0
        %v2786 = vadd.f32 %v2757, %v2785
        %v2787 = vpop.f32.mrf.mxu0
        %v2788 = vadd.f32 %v2759, %v2787
        %2789 = vdwg.mxu0
        %v2790 = vmax.f32 %v2771, 0.0
        %v2791 = vmax.f32 %v2773, 0.0
        %v2792 = vmax.f32 %v2776, 0.0
        %v2793 = vmax.f32 %v2778, 0.0
        %v2794 = vmax.f32 %v2781, 0.0
        %v2795 = vmax.f32 %v2783, 0.0
        %v2796 = vmax.f32 %v2786, 0.0
        %v2797 = vmax.f32 %v2788, 0.0
        %v2798 = vpack.c.bf16 %v2790, %v2790
        %v2799 = vpack.c.bf16 %v2791, %v2791
        %v2800 = vpack.c.bf16 %v2792, %v2792
        %v2801 = vpack.c.bf16 %v2793, %v2793
        %v2802 = vpack.c.bf16 %v2794, %v2794
        %v2803 = vpack.c.bf16 %v2795, %v2795
        %v2804 = vpack.c.bf16 %v2796, %v2796
        %v2805 = vpack.c.bf16 %v2797, %v2797
        %s2806 = scalar_lea.vmem [#allocation3], 32
        %2807 = vst [vmem:[%s2806] sm:$0xf] %v2798
        %2808 = vst [vmem:[%s2806 + $0x4] sm:$0xf] %v2799
        %2809 = vst [vmem:[%s2806 + $0x8] sm:$0xf] %v2800
        %2810 = vst [vmem:[%s2806 + $0xc] sm:$0xf] %v2801
        %2811 = vst [vmem:[%s2806 + $0x10] sm:$0xf] %v2802
        %2812 = vst [vmem:[%s2806 + $0x14] sm:$0xf] %v2803
        %2813 = vst [vmem:[%s2806 + $0x18] sm:$0xf] %v2804
        %2814 = vst [vmem:[%s2806 + $0x1c] sm:$0xf] %v2805
        %v2815 = vadd.f32 %v2790, %v2791
        %v2816 = vadd.f32 %v2815, %v2792
        %v2817 = vadd.f32 %v2816, %v2793
        %v2818 = vadd.f32 %v2817, %v2794
        %v2819 = vadd.f32 %v2818, %v2795
        %v2820 = vadd.f32 %v2819, %v2796
        %v2821 = vadd.f32 %v2820, %v2797
        %v2822 = vrot.slane %v2821, 4
        %v2823 = vadd.f32 %v2821, %v2822
        %v2824 = vrot.slane %v2823, 2
        %v2825 = vadd.f32 %v2823, %v2824
        %v2826 = vrot.slane %v2825, 1
        %v2827 = vadd.f32 %v2825, %v2826
        %v2828 = vadd.f32 %v1887, %v2827
        %v2829 = vmul.f32 %v2828, 0.015625
        %v2830 = vld [vmem:[%s3] sm:$0xff]
        %v2831 = vld [vmem:[%s3 + $0x8] sm:$0xff]
        %v2832 = vld [vmem:[%s3 + $0x10] sm:$0xff]
        %v2833 = vld [vmem:[%s3 + $0x18] sm:$0xff]
        %v2834 = vld [vmem:[%s3 + $0x20] sm:$0xff]
        %v2835 = vld [vmem:[%s3 + $0x28] sm:$0xff]
        %v2836 = vld [vmem:[%s3 + $0x30] sm:$0xff]
        %v2837 = vld [vmem:[%s3 + $0x38] sm:$0xff]
        %v2838 = vld [vmem:[%s3 + $0x40] sm:$0xff]
        %v2839 = vld [vmem:[%s3 + $0x48] sm:$0xff]
        %v2840 = vld [vmem:[%s3 + $0x50] sm:$0xff]
        %v2841 = vld [vmem:[%s3 + $0x58] sm:$0xff]
        %v2842 = vld [vmem:[%s3 + $0x60] sm:$0xff]
        %v2843 = vld [vmem:[%s3 + $0x68] sm:$0xff]
        %v2844 = vld [vmem:[%s3 + $0x70] sm:$0xff]
        %v2845 = vld [vmem:[%s3 + $0x78] sm:$0xff]
        %v2846 = vld [vmem:[%s4] sm:$0x1]
        %2847 = vmatpush.msra.mxu0 %v2845
        %2848 = vmatpush.msra.mxu0 %v2844
        %2849 = vmatpush.msra.mxu0 %v2843
        %2850 = vmatpush.msra.mxu0 %v2842
        %2851 = vmatpush.msra.mxu0 %v2841
        %2852 = vmatpush.msra.mxu0 %v2840
        %2853 = vmatpush.msra.mxu0 %v2839
        %2854 = vmatpush.msra.mxu0 %v2838
        %2855 = vmatpush.msra.mxu0 %v2837
        %2856 = vmatpush.msra.mxu0 %v2836
        %2857 = vmatpush.msra.mxu0 %v2835
        %2858 = vmatpush.msra.mxu0 %v2834
        %2859 = vmatpush.msra.mxu0 %v2833
        %2860 = vmatpush.msra.mxu0 %v2832
        %2861 = vmatpush.msra.mxu0 %v2831
        %2862 = vmatpush.msra.mxu0 %v2830
        %2863 = vmatmul.f32.gmra.mxu0 %v2829
        %v2864 = vpop.f32.mrf.mxu0
        %v2865 = vadd.f32 %v2846, %v2864
        %2866 = vdwg.mxu0
        %v2867 = vmax.f32 %v2865, 0.0
        %v2868 = vld [vmem:[%s5] sm:$0xff]
        %v2869 = vld [vmem:[%s5 + $0x8] sm:$0xff]
        %v2870 = vld [vmem:[%s5 + $0x10] sm:$0xff]
        %v2871 = vld [vmem:[%s5 + $0x18] sm:$0xff]
        %v2872 = vld [vmem:[%s5 + $0x20] sm:$0xff]
        %v2873 = vld [vmem:[%s5 + $0x28] sm:$0xff]
        %v2874 = vld [vmem:[%s5 + $0x30] sm:$0xff]
        %v2875 = vld [vmem:[%s5 + $0x38] sm:$0xff]
        %v2877 = vsel %vm1538, %v2867, 0
        %2879 = vmatpush.msra.mxu0 0.0
        %2880 = vmatpush.msra.mxu0 0.0
        %2881 = vmatpush.msra.mxu0 0.0
        %2882 = vmatpush.msra.mxu0 0.0
        %2883 = vmatpush.msra.mxu0 0.0
        %2884 = vmatpush.msra.mxu0 0.0
        %2885 = vmatpush.msra.mxu0 0.0
        %2886 = vmatpush.msra.mxu0 0.0
        %2887 = vmatpush.msra.mxu0 0.0
        %2888 = vmatpush.msra.mxu0 0.0
        %2889 = vmatpush.msra.mxu0 0.0
        %2890 = vmatpush.msra.mxu0 0.0
        %2891 = vmatpush.msra.mxu0 %v2874
        %2892 = vmatpush.msra.mxu0 %v2872
        %2893 = vmatpush.msra.mxu0 %v2870
        %2894 = vmatpush.msra.mxu0 %v2868
        %2895 = vmatmul.f32.gmra.mxu0 %v2877
        %v2896 = vpop.f32.mrf.mxu0
        %v2897 = vadd.f32 0.0, %v2896
        %2898 = vdwg.mxu0
        %2899 = vmatpush.msra.mxu0 0.0
        %2900 = vmatpush.msra.mxu0 0.0
        %2901 = vmatpush.msra.mxu0 0.0
        %2902 = vmatpush.msra.mxu0 0.0
        %2903 = vmatpush.msra.mxu0 0.0
        %2904 = vmatpush.msra.mxu0 0.0
        %2905 = vmatpush.msra.mxu0 0.0
        %2906 = vmatpush.msra.mxu0 0.0
        %2907 = vmatpush.msra.mxu0 0.0
        %2908 = vmatpush.msra.mxu0 0.0
        %2909 = vmatpush.msra.mxu0 0.0
        %2910 = vmatpush.msra.mxu0 0.0
        %2911 = vmatpush.msra.mxu0 %v2875
        %2912 = vmatpush.msra.mxu0 %v2873
        %2913 = vmatpush.msra.mxu0 %v2871
        %2914 = vmatpush.msra.mxu0 %v2869
        %2915 = vmatmul.f32.gmra.mxu0 %v2877
        %v2916 = vpop.f32.mrf.mxu0
        %v2917 = vadd.f32 0.0, %v2916
        %2918 = vdwg.mxu0
        %v2919 = vmax.f32 %v2897, %v2917
        %v2920 = vsub.f32 %v2897, %v2919
        %v2921 = vmul.f32 %v2920, 1.442695
        %v2922 = vpow.pop %v2921
        %v2923 = vsub.f32 %v2917, %v2919
        %v2924 = vmul.f32 %v2923, 1.442695
        %v2925 = vpow.pop %v2924
        %v2926 = vadd.f32 %v2922, %v2925
        %v2927 = vrcp.pop %v2926
        %v2928 = vld [vmem:[#allocation3] sm:$0xf]
        %v2929 = vld [vmem:[#allocation3 + $0x4] sm:$0xf]
        %v2930 = vld [vmem:[#allocation3 + $0x8] sm:$0xf]
        %v2931 = vld [vmem:[#allocation3 + $0xc] sm:$0xf]
        %v2932 = vld [vmem:[#allocation3 + $0x10] sm:$0xf]
        %v2933 = vld [vmem:[#allocation3 + $0x14] sm:$0xf]
        %v2934 = vld [vmem:[#allocation3 + $0x18] sm:$0xf]
        %v2935 = vld [vmem:[#allocation3 + $0x1c] sm:$0xf]
        %v2936 = vmul.f32 %v2922, %v2927
        %v2937 = vunpack.c.l.bf16 %v2928
        %v2938 = vunpack.c.l.bf16 %v2929
        %v2939 = vunpack.c.l.bf16 %v2930
        %v2940 = vunpack.c.l.bf16 %v2931
        %v2941 = vunpack.c.l.bf16 %v2932
        %v2942 = vunpack.c.l.bf16 %v2933
        %v2943 = vunpack.c.l.bf16 %v2934
        %v2944 = vunpack.c.l.bf16 %v2935
        %v2945 = vperm.slane %v2936, 0
        %v2946 = vmul.f32 %v2937, %v2945
        %v2947 = vmul.f32 %v2938, %v2945
        %v2948 = vmul.f32 %v2939, %v2945
        %v2949 = vmul.f32 %v2940, %v2945
        %v2950 = vmul.f32 %v2941, %v2945
        %v2951 = vmul.f32 %v2942, %v2945
        %v2952 = vmul.f32 %v2943, %v2945
        %v2953 = vmul.f32 %v2944, %v2945
        %v2954 = vld [vmem:[%s2806] sm:$0xf]
        %v2955 = vld [vmem:[%s2806 + $0x4] sm:$0xf]
        %v2956 = vld [vmem:[%s2806 + $0x8] sm:$0xf]
        %v2957 = vld [vmem:[%s2806 + $0xc] sm:$0xf]
        %v2958 = vld [vmem:[%s2806 + $0x10] sm:$0xf]
        %v2959 = vld [vmem:[%s2806 + $0x14] sm:$0xf]
        %v2960 = vld [vmem:[%s2806 + $0x18] sm:$0xf]
        %v2961 = vld [vmem:[%s2806 + $0x1c] sm:$0xf]
        %v2962 = vmul.f32 %v2925, %v2927
        %v2963 = vunpack.c.l.bf16 %v2954
        %v2964 = vunpack.c.l.bf16 %v2955
        %v2965 = vunpack.c.l.bf16 %v2956
        %v2966 = vunpack.c.l.bf16 %v2957
        %v2967 = vunpack.c.l.bf16 %v2958
        %v2968 = vunpack.c.l.bf16 %v2959
        %v2969 = vunpack.c.l.bf16 %v2960
        %v2970 = vunpack.c.l.bf16 %v2961
        %v2971 = vperm.slane %v2962, 0
        %v2972 = vmul.f32 %v2963, %v2971
        %v2973 = vmul.f32 %v2964, %v2971
        %v2974 = vmul.f32 %v2965, %v2971
        %v2975 = vmul.f32 %v2966, %v2971
        %v2976 = vmul.f32 %v2967, %v2971
        %v2977 = vmul.f32 %v2968, %v2971
        %v2978 = vmul.f32 %v2969, %v2971
        %v2979 = vmul.f32 %v2970, %v2971
        %v2980 = vadd.f32 %v2946, %v2972
        %v2981 = vadd.f32 %v2947, %v2973
        %v2982 = vadd.f32 %v2948, %v2974
        %v2983 = vadd.f32 %v2949, %v2975
        %v2984 = vadd.f32 %v2950, %v2976
        %v2985 = vadd.f32 %v2951, %v2977
        %v2986 = vadd.f32 %v2952, %v2978
        %v2987 = vadd.f32 %v2953, %v2979
        %v2988 = vpack.c.bf16 %v2980, %v2980
        %v2989 = vpack.c.bf16 %v2981, %v2981
        %v2990 = vpack.c.bf16 %v2982, %v2982
        %v2991 = vpack.c.bf16 %v2983, %v2983
        %v2992 = vpack.c.bf16 %v2984, %v2984
        %v2993 = vpack.c.bf16 %v2985, %v2985
        %v2994 = vpack.c.bf16 %v2986, %v2986
        %v2995 = vpack.c.bf16 %v2987, %v2987
        %2996 = vst [vmem:[%s261] sm:$0xf] %v2988
        %2997 = vst [vmem:[%s261 + $0x4] sm:$0xf] %v2989
        %2998 = vst [vmem:[%s261 + $0x8] sm:$0xf] %v2990
        %2999 = vst [vmem:[%s261 + $0xc] sm:$0xf] %v2991
        %3000 = vst [vmem:[%s261 + $0x10] sm:$0xf] %v2992
        %3001 = vst [vmem:[%s261 + $0x14] sm:$0xf] %v2993
        %3002 = vst [vmem:[%s261 + $0x18] sm:$0xf] %v2994
        %3003 = vst [vmem:[%s261 + $0x1c] sm:$0xf] %v2995
        %s3004 = sand.u32 %s160, 1
        %s3005 = scalar_lea.sflag [#allocation6], %s3004
        %s3006 = sand.u32 %s160, 1
        %s3007 = smul.addr %s3006, 32
        %s3008 = scalar_lea.vmem [#allocation7], %s3007
        // Predicated region
        $region49: #{tpu_custom_call.1} parent=43 // pred_check
          %p3009 = pneg %p170
        $region50: #{tpu_custom_call.1} parent=43 // pred_check_branch
          %3011 = sbr.rel (%p3009) target = $region52
        $region51: #{tpu_custom_call.1} parent=43 // pred_region
          %3013 = vsyncadd %s3005, 0
          %s3014 = smul.addr %s21, 8
          %s3015 = smul.addr %s3014, 4
          %s3016 = scalar_lea.hbm %s6, %s3015
          %s3017 = sshll.u32 %s3008, 4
          %s3018 = int_to_ptr.vmem [resolvable:$true] %s3017
          %s3019 = sshll.u32 %s3016, 4
          %s3020 = int_to_ptr.hbm [resolvable:$true] %s3019
          %3025 = dma.vmem_to_hbm [thread:$0]  %s3018, 512, %s3020, %s3005, 64, 64, 4
        $region52: #{tpu_custom_call.1} parent=43 // pred_fallthru
          _
      $region44: #{tpu_custom_call.1} parent=5 // pred_fallthru
        _
      %p3026 = scmp.le.s32.totalorder 2, %s16
      // Predicated region
      $region53: #{tpu_custom_call.1} parent=5 // pred_check
        %p3027 = pneg %p3026
      $region54: #{tpu_custom_call.1} parent=5 // pred_check_branch
        %3029 = sbr.rel (%p3027) target = $region56
      $region55: #{tpu_custom_call.1} parent=5 // pred_region
        %s3030 = ssub.s32 %s16, 2
        // Predicated region
        $region57: #{tpu_custom_call.1} parent=55 // pred_check
          %p3031 = pneg %p176
        $region58: #{tpu_custom_call.1} parent=55 // pred_check_branch
          %3033 = sbr.rel (%p3031) target = $region60
        $region59: #{tpu_custom_call.1} parent=55 // pred_region
          %s3034 = sand.u32 %s161, 1
          %s3035 = scalar_lea.sflag [#allocation6], %s3034
          %s3036 = sand.u32 %s161, 1
          %s3037 = smul.addr %s3036, 32
          %s3038 = scalar_lea.vmem [#allocation7], %s3037
          %3040 = dma.done %s3035, 512
        $region60: #{tpu_custom_call.1} parent=55 // pred_fallthru
          _
      $region56: #{tpu_custom_call.1} parent=5 // pred_fallthru
        _
    $region6: #{tpu_custom_call.1} parent=1 // loop_footer
      %s20 = sadd.s32 1, %s16
    $region7: #{tpu_custom_call.1} parent=1 // loop_footer_branch
      %15 = sbr.rel target = $region3
    $region8: #{tpu_custom_call.1} parent=1 // loop_exit
      _
    %3041 = vsyncpa [#allocation5], 1
    %s3042 = scalar_lea.sflag [#allocation5], 1
    %3043 = vsyncpa %s3042, 1
    %3044 = vsyncpa [#allocation6], 1
    %s3045 = scalar_lea.sflag [#allocation6], 1
    %3046 = vsyncpa %s3045, 1

</llo_original>
